<compile_context>
chip_gen: v7x
topology: tpu7x:2x2x1
jax: 0.10.0
libtpu: 0.0.40
codegen_flags: <defaults>
</compile_context>

<pallas_src>
import math

import jax
import jax.numpy as jnp
from jax import lax
from jax.experimental import pallas as pl
from jax.experimental.pallas import tpu as pltpu

GRID_SIZE = 5
SPLINE_ORDER = 3
GRID_RANGE = (-1.0, 1.0)
NUM_BASES = GRID_SIZE + SPLINE_ORDER   # B-spline bases per scalar input (8)
LANE_CHUNK = 128                       # lanes per basis-recursion pass


def _knot_values():
    """Uniform extended knot vector as Python floats (trace-time constants)."""
    h = (GRID_RANGE[1] - GRID_RANGE[0]) / GRID_SIZE
    return tuple(
        GRID_RANGE[0] + i * h
        for i in range(-SPLINE_ORDER, GRID_SIZE + SPLINE_ORDER + 1)
    )


# --------------------------------------------------------------------------- #
# Pallas kernel.  Grid = (M_tiles,), all steps independent ("parallel").
# Per step: build the fused feature slab (silu + all spline bases, channel and
# kernel-position folded together) in VMEM, then one (OUT_CH, K_pad) @
# (K_pad, TILE_M) MXU matmul, add bias, store lane-dense (OUT_CH, TILE_M).
# --------------------------------------------------------------------------- #
def _make_kernel(ck2, group_pad, lane_chunk):
    knots = _knot_values()                 # Python floats only -> no const arrays
    nb0 = GRID_SIZE + 2 * SPLINE_ORDER     # order-0 interval count (11)

    def kernel(x_ref, w_ref, bias_ref, o_ref, slab_ref):
        # Zero the slab once so padding rows between feature groups (and the
        # trailing 128-alignment rows) stay zero; their weight columns are 0.
        @pl.when(pl.program_id(0) == 0)
        def _():
            slab_ref[...] = jnp.zeros_like(slab_ref)

        tile_m = x_ref.shape[1]

        def chunk(ci, carry):
            off = pl.multiple_of(ci * lane_chunk, lane_chunk)
            x = x_ref[:, pl.ds(off, lane_chunk)]          # (C*K2, LANE_CHUNK)

            # ---- base branch: silu(x) -> slab slot 0 ------------------------
            silu = x * (1.0 / (1.0 + jnp.exp(-x)))
            slab_ref[0:ck2, pl.ds(off, lane_chunk)] = silu

            # ---- spline branch: Cox-de Boor with constant-folded reciprocals
            b = [((x >= knots[j]) & (x < knots[j + 1])).astype(jnp.float32)
                 for j in range(nb0)]
            for k in range(1, SPLINE_ORDER + 1):
                nxt = []
                for j in range(nb0 - k):
                    inv_l = 1.0 / (knots[j + k] - knots[j])
                    inv_r = 1.0 / (knots[j + k + 1] - knots[j + 1])
                    nxt.append((x - knots[j]) * inv_l * b[j]
                               + (knots[j + k + 1] - x) * inv_r * b[j + 1])
                b = nxt
            for g in range(len(b)):                        # len(b) == NUM_BASES
                r0 = (g + 1) * group_pad
                slab_ref[r0:r0 + ck2, pl.ds(off, lane_chunk)] = b[g]
            return carry

        lax.fori_loop(0, tile_m // lane_chunk, chunk, 0)

        # ---- single fused MXU matmul (default precision, f32 accumulate) ----
        acc = jnp.dot(w_ref[...], slab_ref[...],
                      preferred_element_type=jnp.float32)   # (OUT_CH, TILE_M)
        o_ref[...] = (acc + bias_ref[...]).astype(o_ref.dtype)

    return kernel


# --------------------------------------------------------------------------- #
# torch.nn.Unfold equivalent, produced directly in the kernel's (C*K2, M)
# layout (row = c*K2 + kh*K + kw, col = n*oh*ow + y*ow + x).
# --------------------------------------------------------------------------- #
def _unfold_to_ck2_m(x, kernel_size, stride, padding, dilation):
    n, c, h, w = x.shape
    k = kernel_size
    oh = (h + 2 * padding - dilation * (k - 1) - 1) // stride + 1
    ow = (w + 2 * padding - dilation * (k - 1) - 1) // stride + 1
    xp = jnp.pad(x, ((0, 0), (0, 0), (padding, padding), (padding, padding)))
    pats = []
    for kh in range(k):
        for kw in range(k):
            hs, ws = kh * dilation, kw * dilation
            pats.append(
                xp[:, :, hs:hs + stride * (oh - 1) + 1:stride,
                         ws:ws + stride * (ow - 1) + 1:stride])
    p = jnp.stack(pats, axis=2)                      # (N, C, K2, oh, ow)
    p = p.transpose(1, 2, 0, 3, 4).reshape(c * k * k, n * oh * ow)
    return p, oh, ow


def kan_conv2d(x, base_w, spline_w, bias, *, kernel_size, stride=1, padding=0,
               dilation=1, tile_m=512):
    n, c, _, _ = x.shape
    k2 = kernel_size * kernel_size
    out_ch = base_w.shape[-1]
    assert spline_w.shape == (c, k2, NUM_BASES, out_ch)

    xk, oh, ow = _unfold_to_ck2_m(x.astype(jnp.float32), kernel_size, stride,
                                  padding, dilation)          # (C*K2, M)
    ck2, m = xk.shape

    tile_m = max(LANE_CHUNK, (tile_m // LANE_CHUNK) * LANE_CHUNK)
    m_pad = ((m + tile_m - 1) // tile_m) * tile_m
    if m_pad != m:
        xk = jnp.pad(xk, ((0, 0), (0, m_pad - m)))

    # Fused weight (OUT_CH, K_pad): slot 0 = base weights (SiLU branch),
    # slot 1+g = spline weights of basis g.  Slots padded to multiples of 8
    # rows, total contraction padded to a multiple of 128; pad columns are 0.
    group_pad = ((ck2 + 7) // 8) * 8
    k_pad = (NUM_BASES + 1) * group_pad
    k_pad = ((k_pad + 127) // 128) * 128

    w_fused = jnp.zeros((out_ch, k_pad), jnp.float32)
    w_fused = w_fused.at[:, :ck2].set(base_w.reshape(ck2, out_ch).T)
    for g in range(NUM_BASES):
        r0 = (g + 1) * group_pad
        w_fused = w_fused.at[:, r0:r0 + ck2].set(
            spline_w[:, :, g, :].reshape(ck2, out_ch).T)
    bias2d = bias.reshape(out_ch, 1).astype(jnp.float32)

    out = pl.pallas_call(
        _make_kernel(ck2, group_pad, LANE_CHUNK),
        out_shape=jax.ShapeDtypeStruct((out_ch, m_pad), x.dtype),
        grid_spec=pltpu.PrefetchScalarGridSpec(
            num_scalar_prefetch=0,
            grid=(m_pad // tile_m,),
            in_specs=[
                pl.BlockSpec((ck2, tile_m), lambda mi: (0, mi)),
                pl.BlockSpec((out_ch, k_pad), lambda mi: (0, 0)),  # resident
                pl.BlockSpec((out_ch, 1), lambda mi: (0, 0)),      # resident
            ],
            out_specs=pl.BlockSpec((out_ch, tile_m), lambda mi: (0, mi)),
            scratch_shapes=[pltpu.VMEM((k_pad, tile_m), jnp.float32)],
        ),
        compiler_params=pltpu.CompilerParams(
            dimension_semantics=("parallel",),
        ),
    )(xk, w_fused, bias2d)

    out = out[:, :m].reshape(out_ch, n, oh, ow).transpose(1, 0, 2, 3)
    return out


# --------------------------------------------------------------------------- #
# Pure-JAX reference (mirrors the PyTorch module; f32 HIGHEST-precision dots).
# --------------------------------------------------------------------------- #
def kan_conv2d_ref(x, base_w, spline_w, bias, *, kernel_size, stride=1,
                   padding=0, dilation=1):
    n, c, h, w = x.shape
    k = kernel_size
    out_ch = base_w.shape[-1]
    oh = (h + 2 * padding - dilation * (k - 1) - 1) // stride + 1
    ow = (w + 2 * padding - dilation * (k - 1) - 1) // stride + 1
    xp = jnp.pad(x, ((0, 0), (0, 0), (padding, padding), (padding, padding)))
    cols = []
    for kh in range(k):
        for kw in range(k):
            hs, ws = kh * dilation, kw * dilation
            cols.append(xp[:, :, hs:hs + stride * (oh - 1) + 1:stride,
                               ws:ws + stride * (ow - 1) + 1:stride])
    pats = jnp.stack(cols, axis=2).reshape(n, c * k * k, oh * ow)
    pats = pats.transpose(0, 2, 1).reshape(n, oh * ow, c, k * k)   # (N,L,C,K2)

    knots = jnp.array(_knot_values(), jnp.float32)
    xg = pats[..., None]
    b = ((xg >= knots[:-1]) & (xg < knots[1:])).astype(jnp.float32)
    for kk in range(1, SPLINE_ORDER + 1):
        b = ((xg - knots[:-(kk + 1)]) / (knots[kk:-1] - knots[:-(kk + 1)])
             * b[..., :-1]
             + (knots[kk + 1:] - xg) / (knots[kk + 1:] - knots[1:-kk])
             * b[..., 1:])
    silu = pats * jax.nn.sigmoid(pats)
    y = (jnp.einsum("nlck,cko->nlo", silu, base_w,
                    precision=lax.Precision.HIGHEST)
         + jnp.einsum("nlckg,ckgo->nlo", b, spline_w,
                      precision=lax.Precision.HIGHEST)
         + bias[None, None, :])
    return y.transpose(0, 2, 1).reshape(n, out_ch, oh, ow)


if __name__ == "__main__":
    N, C, H, W = 2, 4, 16, 16
    OUT_CH = 8
    K = 3
    STRIDE, PAD, DIL = 1, 1, 1
    K2 = K * K

    key = jax.random.PRNGKey(0)
    kx, kb, ks, kbias = jax.random.split(key, 4)
    x = jax.random.normal(kx, (N, C, H, W), jnp.float32)
    # Per-input-channel KANLinear2 params (one KANLinear2(K2 -> OUT_CH) per channel).
    base_w = jax.random.normal(kb, (C, K2, OUT_CH), jnp.float32) / math.sqrt(K2)
    spline_w = jax.random.normal(ks, (C, K2, NUM_BASES, OUT_CH), jnp.float32) * (
        0.1 / math.sqrt(K2))
    bias = jax.random.normal(kbias, (OUT_CH,), jnp.float32) * 0.1

    out = kan_conv2d(x, base_w, spline_w, bias, kernel_size=K, stride=STRIDE,
                     padding=PAD, dilation=DIL)
    out = jax.block_until_ready(out)

    ref = kan_conv2d_ref(x, base_w, spline_w, bias, kernel_size=K,
                         stride=STRIDE, padding=PAD, dilation=DIL)
    ref = jax.block_until_ready(ref)

    assert out.shape == (N, OUT_CH, H, W), out.shape
    max_err = float(jnp.max(jnp.abs(out - ref)))
    assert jnp.allclose(out, ref, atol=3e-2, rtol=3e-2), max_err
    print("KERNEL_OK")
</pallas_src>

<mosaic_0001>
module attributes {stable_mosaic.version = 11 : i64} {
  func.func @kernel(%arg0: i32, %arg1: memref<36x512xf32, #tpu.memory_space<vmem>>, %arg2: memref<8x384xf32, #tpu.memory_space<vmem>>, %arg3: memref<8x1xf32, #tpu.memory_space<vmem>>, %arg4: memref<8x512xf32, #tpu.memory_space<vmem>>, %arg5: memref<384x512xf32, #tpu.memory_space<vmem>>) attributes {dimension_semantics = [#tpu.dimension_semantics<parallel>], iteration_bounds = array<i64: 1>, scalar_prefetch = 0 : i64, scratch_operands = 1 : i64, tpu.core_type = #tpu.core_type<tc>, window_params = [{transform_indices = @transform_0, window_bounds = array<i64: 36, 512>}, {pipeline_mode = #tpu.pipeline_mode<synchronous>, transform_indices = @transform_1, window_bounds = array<i64: 8, 384>}, {pipeline_mode = #tpu.pipeline_mode<synchronous>, transform_indices = @transform_2, window_bounds = array<i64: 8, 1>}, {transform_indices = @transform_3, window_bounds = array<i64: 8, 512>}]} {
    %c0_i32 = arith.constant 0 : i32
    %0 = arith.cmpi eq, %arg0, %c0_i32 : i32
    %1 = arith.extui %0 : i1 to i32
    %c0_i32_0 = arith.constant 0 : i32
    %2 = arith.cmpi ne, %1, %c0_i32_0 : i32
    scf.if %2 {
      %cst_10 = arith.constant 0.000000e+00 : f32
      %11 = vector.broadcast %cst_10 : f32 to vector<384x512xf32>
      %c0_11 = arith.constant 0 : index
      %c0_12 = arith.constant 0 : index
      %12 = vector.load %arg5[%c0_11, %c0_12] : memref<384x512xf32, #tpu.memory_space<vmem>>, vector<384x512xf32>
      tpu.vector_store %arg5[%c0_11, %c0_12], %11 {strides = array<i32>} : memref<384x512xf32, #tpu.memory_space<vmem>>, vector<384x512xf32>,
    } else {
    }
    %c0_i32_1 = arith.constant 0 : i32
    %c4_i32 = arith.constant 4 : i32
    %3 = arith.addi %c0_i32_1, %c4_i32 : i32
    %c1_i32 = arith.constant 1 : i32
    scf.for %arg6 = %c0_i32_1 to %3 step %c1_i32  : i32 {
      %c128_i32 = arith.constant 128 : i32
      %11 = arith.muli %arg6, %c128_i32 : i32
      %12 = tpu.assume_multiple %11, 128 : i32
      %c0_10 = arith.constant 0 : index
      %13 = arith.index_cast %12 : i32 to index
      %14 = vector.load %arg1[%c0_10, %13] : memref<36x512xf32, #tpu.memory_space<vmem>>, vector<36x128xf32>
      %cst_11 = arith.constant 0.000000e+00 : f32
      %15 = vector.broadcast %cst_11 : f32 to vector<36x128xf32>
      %16 = arith.subf %15, %14 : vector<36x128xf32>
      %17 = math.exp %16 : vector<36x128xf32>
      %cst_12 = arith.constant 1.000000e+00 : f32
      %18 = vector.broadcast %cst_12 : f32 to vector<36x128xf32>
      %19 = arith.addf %18, %17 : vector<36x128xf32>
      %cst_13 = arith.constant 1.000000e+00 : f32
      %20 = vector.broadcast %cst_13 : f32 to vector<36x128xf32>
      %21 = arith.divf %20, %19 : vector<36x128xf32>
      %22 = arith.mulf %14, %21 : vector<36x128xf32>
      %c0_14 = arith.constant 0 : index
      %23 = arith.index_cast %12 : i32 to index
      %24 = vector.load %arg5[%c0_14, %23] : memref<384x512xf32, #tpu.memory_space<vmem>>, vector<36x128xf32>
      tpu.vector_store %arg5[%c0_14, %23], %22 {strides = array<i32>} : memref<384x512xf32, #tpu.memory_space<vmem>>, vector<36x128xf32>,
      %cst_15 = arith.constant -2.200000e+00 : f32
      %25 = vector.broadcast %cst_15 : f32 to vector<36x128xf32>
      %26 = arith.cmpf oge, %14, %25 : vector<36x128xf32>
      %cst_16 = arith.constant -1.800000e+00 : f32
      %27 = vector.broadcast %cst_16 : f32 to vector<36x128xf32>
      %28 = arith.cmpf olt, %14, %27 : vector<36x128xf32>
      %29 = arith.andi %26, %28 : vector<36x128xi1>
      %30 = arith.extui %29 : vector<36x128xi1> to vector<36x128xi32>
      %31 = arith.sitofp %30 : vector<36x128xi32> to vector<36x128xf32>
      %cst_17 = arith.constant -1.800000e+00 : f32
      %32 = vector.broadcast %cst_17 : f32 to vector<36x128xf32>
      %33 = arith.cmpf oge, %14, %32 : vector<36x128xf32>
      %cst_18 = arith.constant -1.400000e+00 : f32
      %34 = vector.broadcast %cst_18 : f32 to vector<36x128xf32>
      %35 = arith.cmpf olt, %14, %34 : vector<36x128xf32>
      %36 = arith.andi %33, %35 : vector<36x128xi1>
      %37 = arith.extui %36 : vector<36x128xi1> to vector<36x128xi32>
      %38 = arith.sitofp %37 : vector<36x128xi32> to vector<36x128xf32>
      %cst_19 = arith.constant -1.400000e+00 : f32
      %39 = vector.broadcast %cst_19 : f32 to vector<36x128xf32>
      %40 = arith.cmpf oge, %14, %39 : vector<36x128xf32>
      %cst_20 = arith.constant -1.000000e+00 : f32
      %41 = vector.broadcast %cst_20 : f32 to vector<36x128xf32>
      %42 = arith.cmpf olt, %14, %41 : vector<36x128xf32>
      %43 = arith.andi %40, %42 : vector<36x128xi1>
      %44 = arith.extui %43 : vector<36x128xi1> to vector<36x128xi32>
      %45 = arith.sitofp %44 : vector<36x128xi32> to vector<36x128xf32>
      %cst_21 = arith.constant -1.000000e+00 : f32
      %46 = vector.broadcast %cst_21 : f32 to vector<36x128xf32>
      %47 = arith.cmpf oge, %14, %46 : vector<36x128xf32>
      %cst_22 = arith.constant -6.000000e-01 : f32
      %48 = vector.broadcast %cst_22 : f32 to vector<36x128xf32>
      %49 = arith.cmpf olt, %14, %48 : vector<36x128xf32>
      %50 = arith.andi %47, %49 : vector<36x128xi1>
      %51 = arith.extui %50 : vector<36x128xi1> to vector<36x128xi32>
      %52 = arith.sitofp %51 : vector<36x128xi32> to vector<36x128xf32>
      %cst_23 = arith.constant -6.000000e-01 : f32
      %53 = vector.broadcast %cst_23 : f32 to vector<36x128xf32>
      %54 = arith.cmpf oge, %14, %53 : vector<36x128xf32>
      %cst_24 = arith.constant -2.000000e-01 : f32
      %55 = vector.broadcast %cst_24 : f32 to vector<36x128xf32>
      %56 = arith.cmpf olt, %14, %55 : vector<36x128xf32>
      %57 = arith.andi %54, %56 : vector<36x128xi1>
      %58 = arith.extui %57 : vector<36x128xi1> to vector<36x128xi32>
      %59 = arith.sitofp %58 : vector<36x128xi32> to vector<36x128xf32>
      %cst_25 = arith.constant -2.000000e-01 : f32
      %60 = vector.broadcast %cst_25 : f32 to vector<36x128xf32>
      %61 = arith.cmpf oge, %14, %60 : vector<36x128xf32>
      %cst_26 = arith.constant 2.000000e-01 : f32
      %62 = vector.broadcast %cst_26 : f32 to vector<36x128xf32>
      %63 = arith.cmpf olt, %14, %62 : vector<36x128xf32>
      %64 = arith.andi %61, %63 : vector<36x128xi1>
      %65 = arith.extui %64 : vector<36x128xi1> to vector<36x128xi32>
      %66 = arith.sitofp %65 : vector<36x128xi32> to vector<36x128xf32>
      %cst_27 = arith.constant 2.000000e-01 : f32
      %67 = vector.broadcast %cst_27 : f32 to vector<36x128xf32>
      %68 = arith.cmpf oge, %14, %67 : vector<36x128xf32>
      %cst_28 = arith.constant 6.000000e-01 : f32
      %69 = vector.broadcast %cst_28 : f32 to vector<36x128xf32>
      %70 = arith.cmpf olt, %14, %69 : vector<36x128xf32>
      %71 = arith.andi %68, %70 : vector<36x128xi1>
      %72 = arith.extui %71 : vector<36x128xi1> to vector<36x128xi32>
      %73 = arith.sitofp %72 : vector<36x128xi32> to vector<36x128xf32>
      %cst_29 = arith.constant 6.000000e-01 : f32
      %74 = vector.broadcast %cst_29 : f32 to vector<36x128xf32>
      %75 = arith.cmpf oge, %14, %74 : vector<36x128xf32>
      %cst_30 = arith.constant 1.000000e+00 : f32
      %76 = vector.broadcast %cst_30 : f32 to vector<36x128xf32>
      %77 = arith.cmpf olt, %14, %76 : vector<36x128xf32>
      %78 = arith.andi %75, %77 : vector<36x128xi1>
      %79 = arith.extui %78 : vector<36x128xi1> to vector<36x128xi32>
      %80 = arith.sitofp %79 : vector<36x128xi32> to vector<36x128xf32>
      %cst_31 = arith.constant 1.000000e+00 : f32
      %81 = vector.broadcast %cst_31 : f32 to vector<36x128xf32>
      %82 = arith.cmpf oge, %14, %81 : vector<36x128xf32>
      %cst_32 = arith.constant 1.400000e+00 : f32
      %83 = vector.broadcast %cst_32 : f32 to vector<36x128xf32>
      %84 = arith.cmpf olt, %14, %83 : vector<36x128xf32>
      %85 = arith.andi %82, %84 : vector<36x128xi1>
      %86 = arith.extui %85 : vector<36x128xi1> to vector<36x128xi32>
      %87 = arith.sitofp %86 : vector<36x128xi32> to vector<36x128xf32>
      %cst_33 = arith.constant 1.400000e+00 : f32
      %88 = vector.broadcast %cst_33 : f32 to vector<36x128xf32>
      %89 = arith.cmpf oge, %14, %88 : vector<36x128xf32>
      %cst_34 = arith.constant 1.800000e+00 : f32
      %90 = vector.broadcast %cst_34 : f32 to vector<36x128xf32>
      %91 = arith.cmpf olt, %14, %90 : vector<36x128xf32>
      %92 = arith.andi %89, %91 : vector<36x128xi1>
      %93 = arith.extui %92 : vector<36x128xi1> to vector<36x128xi32>
      %94 = arith.sitofp %93 : vector<36x128xi32> to vector<36x128xf32>
      %cst_35 = arith.constant 1.800000e+00 : f32
      %95 = vector.broadcast %cst_35 : f32 to vector<36x128xf32>
      %96 = arith.cmpf oge, %14, %95 : vector<36x128xf32>
      %cst_36 = arith.constant 2.200000e+00 : f32
      %97 = vector.broadcast %cst_36 : f32 to vector<36x128xf32>
      %98 = arith.cmpf olt, %14, %97 : vector<36x128xf32>
      %99 = arith.andi %96, %98 : vector<36x128xi1>
      %100 = arith.extui %99 : vector<36x128xi1> to vector<36x128xi32>
      %101 = arith.sitofp %100 : vector<36x128xi32> to vector<36x128xf32>
      %cst_37 = arith.constant -2.200000e+00 : f32
      %102 = vector.broadcast %cst_37 : f32 to vector<36x128xf32>
      %103 = arith.subf %14, %102 : vector<36x128xf32>
      %cst_38 = arith.constant 2.500000e+00 : f32
      %104 = vector.broadcast %cst_38 : f32 to vector<36x128xf32>
      %105 = arith.mulf %103, %104 : vector<36x128xf32>
      %106 = arith.mulf %105, %31 : vector<36x128xf32>
      %cst_39 = arith.constant -1.400000e+00 : f32
      %107 = vector.broadcast %cst_39 : f32 to vector<36x128xf32>
      %108 = arith.subf %107, %14 : vector<36x128xf32>
      %cst_40 = arith.constant 2.500000e+00 : f32
      %109 = vector.broadcast %cst_40 : f32 to vector<36x128xf32>
      %110 = arith.mulf %108, %109 : vector<36x128xf32>
      %111 = arith.mulf %110, %38 : vector<36x128xf32>
      %112 = arith.addf %106, %111 : vector<36x128xf32>
      %cst_41 = arith.constant -1.800000e+00 : f32
      %113 = vector.broadcast %cst_41 : f32 to vector<36x128xf32>
      %114 = arith.subf %14, %113 : vector<36x128xf32>
      %cst_42 = arith.constant 2.500000e+00 : f32
      %115 = vector.broadcast %cst_42 : f32 to vector<36x128xf32>
      %116 = arith.mulf %114, %115 : vector<36x128xf32>
      %117 = arith.mulf %116, %38 : vector<36x128xf32>
      %cst_43 = arith.constant -1.000000e+00 : f32
      %118 = vector.broadcast %cst_43 : f32 to vector<36x128xf32>
      %119 = arith.subf %118, %14 : vector<36x128xf32>
      %cst_44 = arith.constant 2.500000e+00 : f32
      %120 = vector.broadcast %cst_44 : f32 to vector<36x128xf32>
      %121 = arith.mulf %119, %120 : vector<36x128xf32>
      %122 = arith.mulf %121, %45 : vector<36x128xf32>
      %123 = arith.addf %117, %122 : vector<36x128xf32>
      %cst_45 = arith.constant -1.400000e+00 : f32
      %124 = vector.broadcast %cst_45 : f32 to vector<36x128xf32>
      %125 = arith.subf %14, %124 : vector<36x128xf32>
      %cst_46 = arith.constant 2.500000e+00 : f32
      %126 = vector.broadcast %cst_46 : f32 to vector<36x128xf32>
      %127 = arith.mulf %125, %126 : vector<36x128xf32>
      %128 = arith.mulf %127, %45 : vector<36x128xf32>
      %cst_47 = arith.constant -6.000000e-01 : f32
      %129 = vector.broadcast %cst_47 : f32 to vector<36x128xf32>
      %130 = arith.subf %129, %14 : vector<36x128xf32>
      %cst_48 = arith.constant 2.500000e+00 : f32
      %131 = vector.broadcast %cst_48 : f32 to vector<36x128xf32>
      %132 = arith.mulf %130, %131 : vector<36x128xf32>
      %133 = arith.mulf %132, %52 : vector<36x128xf32>
      %134 = arith.addf %128, %133 : vector<36x128xf32>
      %cst_49 = arith.constant -1.000000e+00 : f32
      %135 = vector.broadcast %cst_49 : f32 to vector<36x128xf32>
      %136 = arith.subf %14, %135 : vector<36x128xf32>
      %cst_50 = arith.constant 2.500000e+00 : f32
      %137 = vector.broadcast %cst_50 : f32 to vector<36x128xf32>
      %138 = arith.mulf %136, %137 : vector<36x128xf32>
      %139 = arith.mulf %138, %52 : vector<36x128xf32>
      %cst_51 = arith.constant -2.000000e-01 : f32
      %140 = vector.broadcast %cst_51 : f32 to vector<36x128xf32>
      %141 = arith.subf %140, %14 : vector<36x128xf32>
      %cst_52 = arith.constant 2.500000e+00 : f32
      %142 = vector.broadcast %cst_52 : f32 to vector<36x128xf32>
      %143 = arith.mulf %141, %142 : vector<36x128xf32>
      %144 = arith.mulf %143, %59 : vector<36x128xf32>
      %145 = arith.addf %139, %144 : vector<36x128xf32>
      %cst_53 = arith.constant -6.000000e-01 : f32
      %146 = vector.broadcast %cst_53 : f32 to vector<36x128xf32>
      %147 = arith.subf %14, %146 : vector<36x128xf32>
      %cst_54 = arith.constant 2.500000e+00 : f32
      %148 = vector.broadcast %cst_54 : f32 to vector<36x128xf32>
      %149 = arith.mulf %147, %148 : vector<36x128xf32>
      %150 = arith.mulf %149, %59 : vector<36x128xf32>
      %cst_55 = arith.constant 2.000000e-01 : f32
      %151 = vector.broadcast %cst_55 : f32 to vector<36x128xf32>
      %152 = arith.subf %151, %14 : vector<36x128xf32>
      %cst_56 = arith.constant 2.500000e+00 : f32
      %153 = vector.broadcast %cst_56 : f32 to vector<36x128xf32>
      %154 = arith.mulf %152, %153 : vector<36x128xf32>
      %155 = arith.mulf %154, %66 : vector<36x128xf32>
      %156 = arith.addf %150, %155 : vector<36x128xf32>
      %cst_57 = arith.constant -2.000000e-01 : f32
      %157 = vector.broadcast %cst_57 : f32 to vector<36x128xf32>
      %158 = arith.subf %14, %157 : vector<36x128xf32>
      %cst_58 = arith.constant 2.500000e+00 : f32
      %159 = vector.broadcast %cst_58 : f32 to vector<36x128xf32>
      %160 = arith.mulf %158, %159 : vector<36x128xf32>
      %161 = arith.mulf %160, %66 : vector<36x128xf32>
      %cst_59 = arith.constant 6.000000e-01 : f32
      %162 = vector.broadcast %cst_59 : f32 to vector<36x128xf32>
      %163 = arith.subf %162, %14 : vector<36x128xf32>
      %cst_60 = arith.constant 2.500000e+00 : f32
      %164 = vector.broadcast %cst_60 : f32 to vector<36x128xf32>
      %165 = arith.mulf %163, %164 : vector<36x128xf32>
      %166 = arith.mulf %165, %73 : vector<36x128xf32>
      %167 = arith.addf %161, %166 : vector<36x128xf32>
      %cst_61 = arith.constant 2.000000e-01 : f32
      %168 = vector.broadcast %cst_61 : f32 to vector<36x128xf32>
      %169 = arith.subf %14, %168 : vector<36x128xf32>
      %cst_62 = arith.constant 2.500000e+00 : f32
      %170 = vector.broadcast %cst_62 : f32 to vector<36x128xf32>
      %171 = arith.mulf %169, %170 : vector<36x128xf32>
      %172 = arith.mulf %171, %73 : vector<36x128xf32>
      %cst_63 = arith.constant 1.000000e+00 : f32
      %173 = vector.broadcast %cst_63 : f32 to vector<36x128xf32>
      %174 = arith.subf %173, %14 : vector<36x128xf32>
      %cst_64 = arith.constant 2.500000e+00 : f32
      %175 = vector.broadcast %cst_64 : f32 to vector<36x128xf32>
      %176 = arith.mulf %174, %175 : vector<36x128xf32>
      %177 = arith.mulf %176, %80 : vector<36x128xf32>
      %178 = arith.addf %172, %177 : vector<36x128xf32>
      %cst_65 = arith.constant 6.000000e-01 : f32
      %179 = vector.broadcast %cst_65 : f32 to vector<36x128xf32>
      %180 = arith.subf %14, %179 : vector<36x128xf32>
      %cst_66 = arith.constant 2.500000e+00 : f32
      %181 = vector.broadcast %cst_66 : f32 to vector<36x128xf32>
      %182 = arith.mulf %180, %181 : vector<36x128xf32>
      %183 = arith.mulf %182, %80 : vector<36x128xf32>
      %cst_67 = arith.constant 1.400000e+00 : f32
      %184 = vector.broadcast %cst_67 : f32 to vector<36x128xf32>
      %185 = arith.subf %184, %14 : vector<36x128xf32>
      %cst_68 = arith.constant 2.500000e+00 : f32
      %186 = vector.broadcast %cst_68 : f32 to vector<36x128xf32>
      %187 = arith.mulf %185, %186 : vector<36x128xf32>
      %188 = arith.mulf %187, %87 : vector<36x128xf32>
      %189 = arith.addf %183, %188 : vector<36x128xf32>
      %cst_69 = arith.constant 1.000000e+00 : f32
      %190 = vector.broadcast %cst_69 : f32 to vector<36x128xf32>
      %191 = arith.subf %14, %190 : vector<36x128xf32>
      %cst_70 = arith.constant 2.500000e+00 : f32
      %192 = vector.broadcast %cst_70 : f32 to vector<36x128xf32>
      %193 = arith.mulf %191, %192 : vector<36x128xf32>
      %194 = arith.mulf %193, %87 : vector<36x128xf32>
      %cst_71 = arith.constant 1.800000e+00 : f32
      %195 = vector.broadcast %cst_71 : f32 to vector<36x128xf32>
      %196 = arith.subf %195, %14 : vector<36x128xf32>
      %cst_72 = arith.constant 2.500000e+00 : f32
      %197 = vector.broadcast %cst_72 : f32 to vector<36x128xf32>
      %198 = arith.mulf %196, %197 : vector<36x128xf32>
      %199 = arith.mulf %198, %94 : vector<36x128xf32>
      %200 = arith.addf %194, %199 : vector<36x128xf32>
      %cst_73 = arith.constant 1.400000e+00 : f32
      %201 = vector.broadcast %cst_73 : f32 to vector<36x128xf32>
      %202 = arith.subf %14, %201 : vector<36x128xf32>
      %cst_74 = arith.constant 2.500000e+00 : f32
      %203 = vector.broadcast %cst_74 : f32 to vector<36x128xf32>
      %204 = arith.mulf %202, %203 : vector<36x128xf32>
      %205 = arith.mulf %204, %94 : vector<36x128xf32>
      %cst_75 = arith.constant 2.200000e+00 : f32
      %206 = vector.broadcast %cst_75 : f32 to vector<36x128xf32>
      %207 = arith.subf %206, %14 : vector<36x128xf32>
      %cst_76 = arith.constant 2.500000e+00 : f32
      %208 = vector.broadcast %cst_76 : f32 to vector<36x128xf32>
      %209 = arith.mulf %207, %208 : vector<36x128xf32>
      %210 = arith.mulf %209, %101 : vector<36x128xf32>
      %211 = arith.addf %205, %210 : vector<36x128xf32>
      %cst_77 = arith.constant -2.200000e+00 : f32
      %212 = vector.broadcast %cst_77 : f32 to vector<36x128xf32>
      %213 = arith.subf %14, %212 : vector<36x128xf32>
      %cst_78 = arith.constant 1.250000e+00 : f32
      %214 = vector.broadcast %cst_78 : f32 to vector<36x128xf32>
      %215 = arith.mulf %213, %214 : vector<36x128xf32>
      %216 = arith.mulf %215, %112 : vector<36x128xf32>
      %cst_79 = arith.constant -1.000000e+00 : f32
      %217 = vector.broadcast %cst_79 : f32 to vector<36x128xf32>
      %218 = arith.subf %217, %14 : vector<36x128xf32>
      %cst_80 = arith.constant 1.250000e+00 : f32
      %219 = vector.broadcast %cst_80 : f32 to vector<36x128xf32>
      %220 = arith.mulf %218, %219 : vector<36x128xf32>
      %221 = arith.mulf %220, %123 : vector<36x128xf32>
      %222 = arith.addf %216, %221 : vector<36x128xf32>
      %cst_81 = arith.constant -1.800000e+00 : f32
      %223 = vector.broadcast %cst_81 : f32 to vector<36x128xf32>
      %224 = arith.subf %14, %223 : vector<36x128xf32>
      %cst_82 = arith.constant 1.250000e+00 : f32
      %225 = vector.broadcast %cst_82 : f32 to vector<36x128xf32>
      %226 = arith.mulf %224, %225 : vector<36x128xf32>
      %227 = arith.mulf %226, %123 : vector<36x128xf32>
      %cst_83 = arith.constant -6.000000e-01 : f32
      %228 = vector.broadcast %cst_83 : f32 to vector<36x128xf32>
      %229 = arith.subf %228, %14 : vector<36x128xf32>
      %cst_84 = arith.constant 1.250000e+00 : f32
      %230 = vector.broadcast %cst_84 : f32 to vector<36x128xf32>
      %231 = arith.mulf %229, %230 : vector<36x128xf32>
      %232 = arith.mulf %231, %134 : vector<36x128xf32>
      %233 = arith.addf %227, %232 : vector<36x128xf32>
      %cst_85 = arith.constant -1.400000e+00 : f32
      %234 = vector.broadcast %cst_85 : f32 to vector<36x128xf32>
      %235 = arith.subf %14, %234 : vector<36x128xf32>
      %cst_86 = arith.constant 1.250000e+00 : f32
      %236 = vector.broadcast %cst_86 : f32 to vector<36x128xf32>
      %237 = arith.mulf %235, %236 : vector<36x128xf32>
      %238 = arith.mulf %237, %134 : vector<36x128xf32>
      %cst_87 = arith.constant -2.000000e-01 : f32
      %239 = vector.broadcast %cst_87 : f32 to vector<36x128xf32>
      %240 = arith.subf %239, %14 : vector<36x128xf32>
      %cst_88 = arith.constant 1.250000e+00 : f32
      %241 = vector.broadcast %cst_88 : f32 to vector<36x128xf32>
      %242 = arith.mulf %240, %241 : vector<36x128xf32>
      %243 = arith.mulf %242, %145 : vector<36x128xf32>
      %244 = arith.addf %238, %243 : vector<36x128xf32>
      %cst_89 = arith.constant -1.000000e+00 : f32
      %245 = vector.broadcast %cst_89 : f32 to vector<36x128xf32>
      %246 = arith.subf %14, %245 : vector<36x128xf32>
      %cst_90 = arith.constant 1.250000e+00 : f32
      %247 = vector.broadcast %cst_90 : f32 to vector<36x128xf32>
      %248 = arith.mulf %246, %247 : vector<36x128xf32>
      %249 = arith.mulf %248, %145 : vector<36x128xf32>
      %cst_91 = arith.constant 2.000000e-01 : f32
      %250 = vector.broadcast %cst_91 : f32 to vector<36x128xf32>
      %251 = arith.subf %250, %14 : vector<36x128xf32>
      %cst_92 = arith.constant 1.250000e+00 : f32
      %252 = vector.broadcast %cst_92 : f32 to vector<36x128xf32>
      %253 = arith.mulf %251, %252 : vector<36x128xf32>
      %254 = arith.mulf %253, %156 : vector<36x128xf32>
      %255 = arith.addf %249, %254 : vector<36x128xf32>
      %cst_93 = arith.constant -6.000000e-01 : f32
      %256 = vector.broadcast %cst_93 : f32 to vector<36x128xf32>
      %257 = arith.subf %14, %256 : vector<36x128xf32>
      %cst_94 = arith.constant 1.250000e+00 : f32
      %258 = vector.broadcast %cst_94 : f32 to vector<36x128xf32>
      %259 = arith.mulf %257, %258 : vector<36x128xf32>
      %260 = arith.mulf %259, %156 : vector<36x128xf32>
      %cst_95 = arith.constant 6.000000e-01 : f32
      %261 = vector.broadcast %cst_95 : f32 to vector<36x128xf32>
      %262 = arith.subf %261, %14 : vector<36x128xf32>
      %cst_96 = arith.constant 1.250000e+00 : f32
      %263 = vector.broadcast %cst_96 : f32 to vector<36x128xf32>
      %264 = arith.mulf %262, %263 : vector<36x128xf32>
      %265 = arith.mulf %264, %167 : vector<36x128xf32>
      %266 = arith.addf %260, %265 : vector<36x128xf32>
      %cst_97 = arith.constant -2.000000e-01 : f32
      %267 = vector.broadcast %cst_97 : f32 to vector<36x128xf32>
      %268 = arith.subf %14, %267 : vector<36x128xf32>
      %cst_98 = arith.constant 1.250000e+00 : f32
      %269 = vector.broadcast %cst_98 : f32 to vector<36x128xf32>
      %270 = arith.mulf %268, %269 : vector<36x128xf32>
      %271 = arith.mulf %270, %167 : vector<36x128xf32>
      %cst_99 = arith.constant 1.000000e+00 : f32
      %272 = vector.broadcast %cst_99 : f32 to vector<36x128xf32>
      %273 = arith.subf %272, %14 : vector<36x128xf32>
      %cst_100 = arith.constant 1.250000e+00 : f32
      %274 = vector.broadcast %cst_100 : f32 to vector<36x128xf32>
      %275 = arith.mulf %273, %274 : vector<36x128xf32>
      %276 = arith.mulf %275, %178 : vector<36x128xf32>
      %277 = arith.addf %271, %276 : vector<36x128xf32>
      %cst_101 = arith.constant 2.000000e-01 : f32
      %278 = vector.broadcast %cst_101 : f32 to vector<36x128xf32>
      %279 = arith.subf %14, %278 : vector<36x128xf32>
      %cst_102 = arith.constant 1.250000e+00 : f32
      %280 = vector.broadcast %cst_102 : f32 to vector<36x128xf32>
      %281 = arith.mulf %279, %280 : vector<36x128xf32>
      %282 = arith.mulf %281, %178 : vector<36x128xf32>
      %cst_103 = arith.constant 1.400000e+00 : f32
      %283 = vector.broadcast %cst_103 : f32 to vector<36x128xf32>
      %284 = arith.subf %283, %14 : vector<36x128xf32>
      %cst_104 = arith.constant 1.250000e+00 : f32
      %285 = vector.broadcast %cst_104 : f32 to vector<36x128xf32>
      %286 = arith.mulf %284, %285 : vector<36x128xf32>
      %287 = arith.mulf %286, %189 : vector<36x128xf32>
      %288 = arith.addf %282, %287 : vector<36x128xf32>
      %cst_105 = arith.constant 6.000000e-01 : f32
      %289 = vector.broadcast %cst_105 : f32 to vector<36x128xf32>
      %290 = arith.subf %14, %289 : vector<36x128xf32>
      %cst_106 = arith.constant 1.250000e+00 : f32
      %291 = vector.broadcast %cst_106 : f32 to vector<36x128xf32>
      %292 = arith.mulf %290, %291 : vector<36x128xf32>
      %293 = arith.mulf %292, %189 : vector<36x128xf32>
      %cst_107 = arith.constant 1.800000e+00 : f32
      %294 = vector.broadcast %cst_107 : f32 to vector<36x128xf32>
      %295 = arith.subf %294, %14 : vector<36x128xf32>
      %cst_108 = arith.constant 1.250000e+00 : f32
      %296 = vector.broadcast %cst_108 : f32 to vector<36x128xf32>
      %297 = arith.mulf %295, %296 : vector<36x128xf32>
      %298 = arith.mulf %297, %200 : vector<36x128xf32>
      %299 = arith.addf %293, %298 : vector<36x128xf32>
      %cst_109 = arith.constant 1.000000e+00 : f32
      %300 = vector.broadcast %cst_109 : f32 to vector<36x128xf32>
      %301 = arith.subf %14, %300 : vector<36x128xf32>
      %cst_110 = arith.constant 1.250000e+00 : f32
      %302 = vector.broadcast %cst_110 : f32 to vector<36x128xf32>
      %303 = arith.mulf %301, %302 : vector<36x128xf32>
      %304 = arith.mulf %303, %200 : vector<36x128xf32>
      %cst_111 = arith.constant 2.200000e+00 : f32
      %305 = vector.broadcast %cst_111 : f32 to vector<36x128xf32>
      %306 = arith.subf %305, %14 : vector<36x128xf32>
      %cst_112 = arith.constant 1.250000e+00 : f32
      %307 = vector.broadcast %cst_112 : f32 to vector<36x128xf32>
      %308 = arith.mulf %306, %307 : vector<36x128xf32>
      %309 = arith.mulf %308, %211 : vector<36x128xf32>
      %310 = arith.addf %304, %309 : vector<36x128xf32>
      %cst_113 = arith.constant -2.200000e+00 : f32
      %311 = vector.broadcast %cst_113 : f32 to vector<36x128xf32>
      %312 = arith.subf %14, %311 : vector<36x128xf32>
      %cst_114 = arith.constant 0.833333313 : f32
      %313 = vector.broadcast %cst_114 : f32 to vector<36x128xf32>
      %314 = arith.mulf %312, %313 : vector<36x128xf32>
      %315 = arith.mulf %314, %222 : vector<36x128xf32>
      %cst_115 = arith.constant -6.000000e-01 : f32
      %316 = vector.broadcast %cst_115 : f32 to vector<36x128xf32>
      %317 = arith.subf %316, %14 : vector<36x128xf32>
      %cst_116 = arith.constant 0.833333313 : f32
      %318 = vector.broadcast %cst_116 : f32 to vector<36x128xf32>
      %319 = arith.mulf %317, %318 : vector<36x128xf32>
      %320 = arith.mulf %319, %233 : vector<36x128xf32>
      %321 = arith.addf %315, %320 : vector<36x128xf32>
      %cst_117 = arith.constant -1.800000e+00 : f32
      %322 = vector.broadcast %cst_117 : f32 to vector<36x128xf32>
      %323 = arith.subf %14, %322 : vector<36x128xf32>
      %cst_118 = arith.constant 0.833333313 : f32
      %324 = vector.broadcast %cst_118 : f32 to vector<36x128xf32>
      %325 = arith.mulf %323, %324 : vector<36x128xf32>
      %326 = arith.mulf %325, %233 : vector<36x128xf32>
      %cst_119 = arith.constant -2.000000e-01 : f32
      %327 = vector.broadcast %cst_119 : f32 to vector<36x128xf32>
      %328 = arith.subf %327, %14 : vector<36x128xf32>
      %cst_120 = arith.constant 0.833333313 : f32
      %329 = vector.broadcast %cst_120 : f32 to vector<36x128xf32>
      %330 = arith.mulf %328, %329 : vector<36x128xf32>
      %331 = arith.mulf %330, %244 : vector<36x128xf32>
      %332 = arith.addf %326, %331 : vector<36x128xf32>
      %cst_121 = arith.constant -1.400000e+00 : f32
      %333 = vector.broadcast %cst_121 : f32 to vector<36x128xf32>
      %334 = arith.subf %14, %333 : vector<36x128xf32>
      %cst_122 = arith.constant 0.833333313 : f32
      %335 = vector.broadcast %cst_122 : f32 to vector<36x128xf32>
      %336 = arith.mulf %334, %335 : vector<36x128xf32>
      %337 = arith.mulf %336, %244 : vector<36x128xf32>
      %cst_123 = arith.constant 2.000000e-01 : f32
      %338 = vector.broadcast %cst_123 : f32 to vector<36x128xf32>
      %339 = arith.subf %338, %14 : vector<36x128xf32>
      %cst_124 = arith.constant 0.833333313 : f32
      %340 = vector.broadcast %cst_124 : f32 to vector<36x128xf32>
      %341 = arith.mulf %339, %340 : vector<36x128xf32>
      %342 = arith.mulf %341, %255 : vector<36x128xf32>
      %343 = arith.addf %337, %342 : vector<36x128xf32>
      %cst_125 = arith.constant -1.000000e+00 : f32
      %344 = vector.broadcast %cst_125 : f32 to vector<36x128xf32>
      %345 = arith.subf %14, %344 : vector<36x128xf32>
      %cst_126 = arith.constant 0.833333313 : f32
      %346 = vector.broadcast %cst_126 : f32 to vector<36x128xf32>
      %347 = arith.mulf %345, %346 : vector<36x128xf32>
      %348 = arith.mulf %347, %255 : vector<36x128xf32>
      %cst_127 = arith.constant 6.000000e-01 : f32
      %349 = vector.broadcast %cst_127 : f32 to vector<36x128xf32>
      %350 = arith.subf %349, %14 : vector<36x128xf32>
      %cst_128 = arith.constant 0.833333313 : f32
      %351 = vector.broadcast %cst_128 : f32 to vector<36x128xf32>
      %352 = arith.mulf %350, %351 : vector<36x128xf32>
      %353 = arith.mulf %352, %266 : vector<36x128xf32>
      %354 = arith.addf %348, %353 : vector<36x128xf32>
      %cst_129 = arith.constant -6.000000e-01 : f32
      %355 = vector.broadcast %cst_129 : f32 to vector<36x128xf32>
      %356 = arith.subf %14, %355 : vector<36x128xf32>
      %cst_130 = arith.constant 0.833333313 : f32
      %357 = vector.broadcast %cst_130 : f32 to vector<36x128xf32>
      %358 = arith.mulf %356, %357 : vector<36x128xf32>
      %359 = arith.mulf %358, %266 : vector<36x128xf32>
      %cst_131 = arith.constant 1.000000e+00 : f32
      %360 = vector.broadcast %cst_131 : f32 to vector<36x128xf32>
      %361 = arith.subf %360, %14 : vector<36x128xf32>
      %cst_132 = arith.constant 0.833333313 : f32
      %362 = vector.broadcast %cst_132 : f32 to vector<36x128xf32>
      %363 = arith.mulf %361, %362 : vector<36x128xf32>
      %364 = arith.mulf %363, %277 : vector<36x128xf32>
      %365 = arith.addf %359, %364 : vector<36x128xf32>
      %cst_133 = arith.constant -2.000000e-01 : f32
      %366 = vector.broadcast %cst_133 : f32 to vector<36x128xf32>
      %367 = arith.subf %14, %366 : vector<36x128xf32>
      %cst_134 = arith.constant 0.833333313 : f32
      %368 = vector.broadcast %cst_134 : f32 to vector<36x128xf32>
      %369 = arith.mulf %367, %368 : vector<36x128xf32>
      %370 = arith.mulf %369, %277 : vector<36x128xf32>
      %cst_135 = arith.constant 1.400000e+00 : f32
      %371 = vector.broadcast %cst_135 : f32 to vector<36x128xf32>
      %372 = arith.subf %371, %14 : vector<36x128xf32>
      %cst_136 = arith.constant 0.833333313 : f32
      %373 = vector.broadcast %cst_136 : f32 to vector<36x128xf32>
      %374 = arith.mulf %372, %373 : vector<36x128xf32>
      %375 = arith.mulf %374, %288 : vector<36x128xf32>
      %376 = arith.addf %370, %375 : vector<36x128xf32>
      %cst_137 = arith.constant 2.000000e-01 : f32
      %377 = vector.broadcast %cst_137 : f32 to vector<36x128xf32>
      %378 = arith.subf %14, %377 : vector<36x128xf32>
      %cst_138 = arith.constant 0.833333313 : f32
      %379 = vector.broadcast %cst_138 : f32 to vector<36x128xf32>
      %380 = arith.mulf %378, %379 : vector<36x128xf32>
      %381 = arith.mulf %380, %288 : vector<36x128xf32>
      %cst_139 = arith.constant 1.800000e+00 : f32
      %382 = vector.broadcast %cst_139 : f32 to vector<36x128xf32>
      %383 = arith.subf %382, %14 : vector<36x128xf32>
      %cst_140 = arith.constant 0.833333313 : f32
      %384 = vector.broadcast %cst_140 : f32 to vector<36x128xf32>
      %385 = arith.mulf %383, %384 : vector<36x128xf32>
      %386 = arith.mulf %385, %299 : vector<36x128xf32>
      %387 = arith.addf %381, %386 : vector<36x128xf32>
      %cst_141 = arith.constant 6.000000e-01 : f32
      %388 = vector.broadcast %cst_141 : f32 to vector<36x128xf32>
      %389 = arith.subf %14, %388 : vector<36x128xf32>
      %cst_142 = arith.constant 0.833333313 : f32
      %390 = vector.broadcast %cst_142 : f32 to vector<36x128xf32>
      %391 = arith.mulf %389, %390 : vector<36x128xf32>
      %392 = arith.mulf %391, %299 : vector<36x128xf32>
      %cst_143 = arith.constant 2.200000e+00 : f32
      %393 = vector.broadcast %cst_143 : f32 to vector<36x128xf32>
      %394 = arith.subf %393, %14 : vector<36x128xf32>
      %cst_144 = arith.constant 0.833333313 : f32
      %395 = vector.broadcast %cst_144 : f32 to vector<36x128xf32>
      %396 = arith.mulf %394, %395 : vector<36x128xf32>
      %397 = arith.mulf %396, %310 : vector<36x128xf32>
      %398 = arith.addf %392, %397 : vector<36x128xf32>
      %c40 = arith.constant 40 : index
      %399 = arith.index_cast %12 : i32 to index
      %400 = vector.load %arg5[%c40, %399] : memref<384x512xf32, #tpu.memory_space<vmem>>, vector<36x128xf32>
      tpu.vector_store %arg5[%c40, %399], %321 {strides = array<i32>} : memref<384x512xf32, #tpu.memory_space<vmem>>, vector<36x128xf32>,
      %c80 = arith.constant 80 : index
      %401 = arith.index_cast %12 : i32 to index
      %402 = vector.load %arg5[%c80, %401] : memref<384x512xf32, #tpu.memory_space<vmem>>, vector<36x128xf32>
      tpu.vector_store %arg5[%c80, %401], %332 {strides = array<i32>} : memref<384x512xf32, #tpu.memory_space<vmem>>, vector<36x128xf32>,
      %c120 = arith.constant 120 : index
      %403 = arith.index_cast %12 : i32 to index
      %404 = vector.load %arg5[%c120, %403] : memref<384x512xf32, #tpu.memory_space<vmem>>, vector<36x128xf32>
      tpu.vector_store %arg5[%c120, %403], %343 {strides = array<i32>} : memref<384x512xf32, #tpu.memory_space<vmem>>, vector<36x128xf32>,
      %c160 = arith.constant 160 : index
      %405 = arith.index_cast %12 : i32 to index
      %406 = vector.load %arg5[%c160, %405] : memref<384x512xf32, #tpu.memory_space<vmem>>, vector<36x128xf32>
      tpu.vector_store %arg5[%c160, %405], %354 {strides = array<i32>} : memref<384x512xf32, #tpu.memory_space<vmem>>, vector<36x128xf32>,
      %c200 = arith.constant 200 : index
      %407 = arith.index_cast %12 : i32 to index
      %408 = vector.load %arg5[%c200, %407] : memref<384x512xf32, #tpu.memory_space<vmem>>, vector<36x128xf32>
      tpu.vector_store %arg5[%c200, %407], %365 {strides = array<i32>} : memref<384x512xf32, #tpu.memory_space<vmem>>, vector<36x128xf32>,
      %c240 = arith.constant 240 : index
      %409 = arith.index_cast %12 : i32 to index
      %410 = vector.load %arg5[%c240, %409] : memref<384x512xf32, #tpu.memory_space<vmem>>, vector<36x128xf32>
      tpu.vector_store %arg5[%c240, %409], %376 {strides = array<i32>} : memref<384x512xf32, #tpu.memory_space<vmem>>, vector<36x128xf32>,
      %c280 = arith.constant 280 : index
      %411 = arith.index_cast %12 : i32 to index
      %412 = vector.load %arg5[%c280, %411] : memref<384x512xf32, #tpu.memory_space<vmem>>, vector<36x128xf32>
      tpu.vector_store %arg5[%c280, %411], %387 {strides = array<i32>} : memref<384x512xf32, #tpu.memory_space<vmem>>, vector<36x128xf32>,
      %c320 = arith.constant 320 : index
      %413 = arith.index_cast %12 : i32 to index
      %414 = vector.load %arg5[%c320, %413] : memref<384x512xf32, #tpu.memory_space<vmem>>, vector<36x128xf32>
      tpu.vector_store %arg5[%c320, %413], %398 {strides = array<i32>} : memref<384x512xf32, #tpu.memory_space<vmem>>, vector<36x128xf32>,
    }
    %c4_i32_2 = arith.constant 4 : i32
    %c0 = arith.constant 0 : index
    %c0_3 = arith.constant 0 : index
    %4 = vector.load %arg2[%c0, %c0_3] : memref<8x384xf32, #tpu.memory_space<vmem>>, vector<8x384xf32>
    %c0_4 = arith.constant 0 : index
    %c0_5 = arith.constant 0 : index
    %5 = vector.load %arg5[%c0_4, %c0_5] : memref<384x512xf32, #tpu.memory_space<vmem>>, vector<384x512xf32>
    %cst = arith.constant dense<0.000000e+00> : vector<8x512xf32>
    %6 = tpu.matmul %4, %5, %cst {dimension_numbers = #tpu.dot_dimension_numbers<[1], [0], [0], [1], [0, 0, 1, 1], [], []>} : vector<8x384xf32>, vector<384x512xf32>, vector<8x512xf32> -> vector<8x512xf32>
    %c0_6 = arith.constant 0 : index
    %c0_7 = arith.constant 0 : index
    %7 = vector.load %arg3[%c0_6, %c0_7] : memref<8x1xf32, #tpu.memory_space<vmem>>, vector<8x1xf32>
    %8 = vector.broadcast %7 : vector<8x1xf32> to vector<8x512xf32>
    %9 = arith.addf %6, %8 : vector<8x512xf32>
    %c0_8 = arith.constant 0 : index
    %c0_9 = arith.constant 0 : index
    %10 = vector.load %arg4[%c0_8, %c0_9] : memref<8x512xf32, #tpu.memory_space<vmem>>, vector<8x512xf32>
    tpu.vector_store %arg4[%c0_8, %c0_9], %9 {strides = array<i32>} : memref<8x512xf32, #tpu.memory_space<vmem>>, vector<8x512xf32>,
    return
  }
  func.func @transform_0(%arg0: i32) -> (i32, i32) {
    %c0_i32 = arith.constant 0 : i32
    %c0_i32_0 = arith.constant 0 : i32
    return %c0_i32, %arg0 : i32, i32
  }
  func.func @transform_1(%arg0: i32) -> (i32, i32) {
    %c0_i32 = arith.constant 0 : i32
    %c0_i32_0 = arith.constant 0 : i32
    %c0_i32_1 = arith.constant 0 : i32
    return %c0_i32, %c0_i32_0 : i32, i32
  }
  func.func @transform_2(%arg0: i32) -> (i32, i32) {
    %c0_i32 = arith.constant 0 : i32
    %c0_i32_0 = arith.constant 0 : i32
    %c0_i32_1 = arith.constant 0 : i32
    return %c0_i32, %c0_i32_0 : i32, i32
  }
  func.func @transform_3(%arg0: i32) -> (i32, i32) {
    %c0_i32 = arith.constant 0 : i32
    %c0_i32_0 = arith.constant 0 : i32
    return %c0_i32, %arg0 : i32, i32
  }
}

</mosaic_0001>

<llo_original>
// kernel: tpu_custom_call.1
$region0: #{tpu_custom_call.1}
  #allocation0 [shape = 'u32[]', space=smem, size = 0x4, offset = 0x4, fixed_abs, tag = 'smem constant byte address 0x4 - core index']
  #allocation1 [shape = 'u32[144,128]{1,0:T(1,128)}', space=vmem, size = 0x12000, scoped, tag = 'internal scratch']
  #allocation2 [shape = 'f32[384,512]{1,0:T(8,128)}', space=vmem, size = 0xc0000, scoped, tag = 'scratch operand']
  %s0 = inlined_call_operand.hbm [shape: f32[36,512], index: 0, kind: input, shape index: {}]
  %s1 = inlined_call_operand.hbm [shape: f32[8,384], index: 1, kind: input, shape index: {}]
  %s2 = inlined_call_operand.vmem [shape: f32[8,1], index: 2, kind: input, shape index: {}]
  %s3 = inlined_call_operand.hbm [shape: f32[8,512], index: 3, kind: output, shape index: {}]
  %s4 = sld [smem:[#allocation0]]
  $region41: #{tpu_custom_call.1} parent=0
    _
  %s6 = ssub.s32 1, %s4
  %s7 = scalar_select 0, %s6, %s4
  $region1: #{tpu_custom_call.1} parent=0
    #allocation3 [shape = 'u8[81920]{0}', space=vmem, size = 0x14000, scoped, tag = 'input window, operand 0, single buffered']
    #allocation4 [shape = 's32[1]{0}', space=sflag, size = 0x4, scoped, tag = 'scoped memory for tpu_custom_call.1']
    #allocation5 [shape = 's32[1]{0}', space=sflag, size = 0x4, scoped, tag = 'scoped memory for tpu_custom_call.1']
    #allocation6 [shape = 'u8[12288]{0}', space=vmem, size = 0x3000, scoped, tag = 'input window, operand 1, single buffered']
    #allocation7 [shape = 's32[1]{0}', space=sflag, size = 0x4, scoped, tag = 'scoped memory for tpu_custom_call.1']
    #allocation8 [shape = 'u8[16384]{0}', space=vmem, size = 0x4000, scoped, tag = 'output window, operand 0, single buffered']
    %8 = vsyncpa [#allocation4], 0
    %9 = vsyncpa [#allocation7], 0
    %10 = vsyncpa [#allocation5], 0
    // Predicated region
    $region2: #{tpu_custom_call.1} parent=1 // pred_check
      _
    $region3: #{tpu_custom_call.1} parent=1 // pred_check_branch
      %12 = sbr.rel (0) target = $region5
    $region4: #{tpu_custom_call.1} parent=1 // pred_region
      %s14 = ssub.s32 2560, 2560
      %15 = vsyncadd [#allocation4], %s14
      %s16 = sshll.u32 [#allocation3], 4
      %s17 = int_to_ptr.vmem [resolvable:$true] %s16
      %22 = dma.hbm_to_vmem [thread:$0]  %s0, 2560, %s17, [#allocation4], 512, 512, 32
    $region5: #{tpu_custom_call.1} parent=1 // pred_fallthru
      _
    // Predicated region
    $region6: #{tpu_custom_call.1} parent=1 // pred_check
      _
    $region7: #{tpu_custom_call.1} parent=1 // pred_check_branch
      %24 = sbr.rel (0) target = $region9
    $region8: #{tpu_custom_call.1} parent=1 // pred_region
      %s26 = ssub.s32 384, 384
      %27 = vsyncadd [#allocation7], %s26
      %s29 = sshll.u32 [#allocation6], 4
      %s30 = int_to_ptr.vmem [resolvable:$true] %s29
      %32 = dma.hbm_to_vmem [thread:$0]  %s1, 384, %s30, [#allocation7]
    $region9: #{tpu_custom_call.1} parent=1 // pred_fallthru
      _
    // Predicated region
    $region10: #{tpu_custom_call.1} parent=1 // pred_check
      _
    $region11: #{tpu_custom_call.1} parent=1 // pred_check_branch
      %34 = sbr.rel (0) target = $region13
    $region12: #{tpu_custom_call.1} parent=1 // pred_region
      _
    $region13: #{tpu_custom_call.1} parent=1 // pred_fallthru
      _
    // Predicated region
    $region14: #{tpu_custom_call.1} parent=1 // pred_check
      _
    $region15: #{tpu_custom_call.1} parent=1 // pred_check_branch
      %36 = sbr.rel (0) target = $region17
    $region16: #{tpu_custom_call.1} parent=1 // pred_region
      %37 = dma.done [#allocation4], 2560
    $region17: #{tpu_custom_call.1} parent=1 // pred_fallthru
      _
    // Predicated region
    $region18: #{tpu_custom_call.1} parent=1 // pred_check
      _
    $region19: #{tpu_custom_call.1} parent=1 // pred_check_branch
      %39 = sbr.rel (0) target = $region21
    $region20: #{tpu_custom_call.1} parent=1 // pred_region
      %40 = dma.done [#allocation7], 384
    $region21: #{tpu_custom_call.1} parent=1 // pred_fallthru
      _
    %p41 = scmp.eq.s32.totalorder 0, 0
    // Predicated region
    $region22: #{tpu_custom_call.1} parent=1 // pred_check
      %p42 = pneg %p41
    $region23: #{tpu_custom_call.1} parent=1 // pred_check_branch
      %44 = sbr.rel (%p42) target = $region25
    $region24: #{tpu_custom_call.1} parent=1 // pred_region
      %45 = vst [vmem:[#allocation2] sm:$0xff] 0.0
      %46 = vst [vmem:[#allocation2 + $0x8] sm:$0xff] 0.0
      %47 = vst [vmem:[#allocation2 + $0x10] sm:$0xff] 0.0
      %48 = vst [vmem:[#allocation2 + $0x18] sm:$0xff] 0.0
      %49 = vst [vmem:[#allocation2 + $0x20] sm:$0xff] 0.0
      %50 = vst [vmem:[#allocation2 + $0x28] sm:$0xff] 0.0
      %51 = vst [vmem:[#allocation2 + $0x30] sm:$0xff] 0.0
      %52 = vst [vmem:[#allocation2 + $0x38] sm:$0xff] 0.0
      %53 = vst [vmem:[#allocation2 + $0x40] sm:$0xff] 0.0
      %54 = vst [vmem:[#allocation2 + $0x48] sm:$0xff] 0.0
      %55 = vst [vmem:[#allocation2 + $0x50] sm:$0xff] 0.0
      %56 = vst [vmem:[#allocation2 + $0x58] sm:$0xff] 0.0
      %57 = vst [vmem:[#allocation2 + $0x60] sm:$0xff] 0.0
      %58 = vst [vmem:[#allocation2 + $0x68] sm:$0xff] 0.0
      %59 = vst [vmem:[#allocation2 + $0x70] sm:$0xff] 0.0
      %60 = vst [vmem:[#allocation2 + $0x78] sm:$0xff] 0.0
      %61 = vst [vmem:[#allocation2 + $0x80] sm:$0xff] 0.0
      %62 = vst [vmem:[#allocation2 + $0x88] sm:$0xff] 0.0
      %63 = vst [vmem:[#allocation2 + $0x90] sm:$0xff] 0.0
      %64 = vst [vmem:[#allocation2 + $0x98] sm:$0xff] 0.0
      %65 = vst [vmem:[#allocation2 + $0xa0] sm:$0xff] 0.0
      %66 = vst [vmem:[#allocation2 + $0xa8] sm:$0xff] 0.0
      %67 = vst [vmem:[#allocation2 + $0xb0] sm:$0xff] 0.0
      %68 = vst [vmem:[#allocation2 + $0xb8] sm:$0xff] 0.0
      %69 = vst [vmem:[#allocation2 + $0xc0] sm:$0xff] 0.0
      %70 = vst [vmem:[#allocation2 + $0xc8] sm:$0xff] 0.0
      %71 = vst [vmem:[#allocation2 + $0xd0] sm:$0xff] 0.0
      %72 = vst [vmem:[#allocation2 + $0xd8] sm:$0xff] 0.0
      %73 = vst [vmem:[#allocation2 + $0xe0] sm:$0xff] 0.0
      %74 = vst [vmem:[#allocation2 + $0xe8] sm:$0xff] 0.0
      %75 = vst [vmem:[#allocation2 + $0xf0] sm:$0xff] 0.0
      %76 = vst [vmem:[#allocation2 + $0xf8] sm:$0xff] 0.0
      %77 = vst [vmem:[#allocation2 + $0x100] sm:$0xff] 0.0
      %78 = vst [vmem:[#allocation2 + $0x108] sm:$0xff] 0.0
      %79 = vst [vmem:[#allocation2 + $0x110] sm:$0xff] 0.0
      %80 = vst [vmem:[#allocation2 + $0x118] sm:$0xff] 0.0
      %81 = vst [vmem:[#allocation2 + $0x120] sm:$0xff] 0.0
      %82 = vst [vmem:[#allocation2 + $0x128] sm:$0xff] 0.0
      %83 = vst [vmem:[#allocation2 + $0x130] sm:$0xff] 0.0
      %84 = vst [vmem:[#allocation2 + $0x138] sm:$0xff] 0.0
      %85 = vst [vmem:[#allocation2 + $0x140] sm:$0xff] 0.0
      %86 = vst [vmem:[#allocation2 + $0x148] sm:$0xff] 0.0
      %87 = vst [vmem:[#allocation2 + $0x150] sm:$0xff] 0.0
      %88 = vst [vmem:[#allocation2 + $0x158] sm:$0xff] 0.0
      %89 = vst [vmem:[#allocation2 + $0x160] sm:$0xff] 0.0
      %90 = vst [vmem:[#allocation2 + $0x168] sm:$0xff] 0.0
      %91 = vst [vmem:[#allocation2 + $0x170] sm:$0xff] 0.0
      %92 = vst [vmem:[#allocation2 + $0x178] sm:$0xff] 0.0
      %93 = vst [vmem:[#allocation2 + $0x180] sm:$0xff] 0.0
      %94 = vst [vmem:[#allocation2 + $0x188] sm:$0xff] 0.0
      %95 = vst [vmem:[#allocation2 + $0x190] sm:$0xff] 0.0
      %96 = vst [vmem:[#allocation2 + $0x198] sm:$0xff] 0.0
      %97 = vst [vmem:[#allocation2 + $0x1a0] sm:$0xff] 0.0
      %98 = vst [vmem:[#allocation2 + $0x1a8] sm:$0xff] 0.0
      %99 = vst [vmem:[#allocation2 + $0x1b0] sm:$0xff] 0.0
      %100 = vst [vmem:[#allocation2 + $0x1b8] sm:$0xff] 0.0
      %101 = vst [vmem:[#allocation2 + $0x1c0] sm:$0xff] 0.0
      %102 = vst [vmem:[#allocation2 + $0x1c8] sm:$0xff] 0.0
      %103 = vst [vmem:[#allocation2 + $0x1d0] sm:$0xff] 0.0
      %104 = vst [vmem:[#allocation2 + $0x1d8] sm:$0xff] 0.0
      %105 = vst [vmem:[#allocation2 + $0x1e0] sm:$0xff] 0.0
      %106 = vst [vmem:[#allocation2 + $0x1e8] sm:$0xff] 0.0
      %107 = vst [vmem:[#allocation2 + $0x1f0] sm:$0xff] 0.0
      %108 = vst [vmem:[#allocation2 + $0x1f8] sm:$0xff] 0.0
      %109 = vst [vmem:[#allocation2 + $0x200] sm:$0xff] 0.0
      %110 = vst [vmem:[#allocation2 + $0x208] sm:$0xff] 0.0
      %111 = vst [vmem:[#allocation2 + $0x210] sm:$0xff] 0.0
      %112 = vst [vmem:[#allocation2 + $0x218] sm:$0xff] 0.0
      %113 = vst [vmem:[#allocation2 + $0x220] sm:$0xff] 0.0
      %114 = vst [vmem:[#allocation2 + $0x228] sm:$0xff] 0.0
      %115 = vst [vmem:[#allocation2 + $0x230] sm:$0xff] 0.0
      %116 = vst [vmem:[#allocation2 + $0x238] sm:$0xff] 0.0
      %117 = vst [vmem:[#allocation2 + $0x240] sm:$0xff] 0.0
      %118 = vst [vmem:[#allocation2 + $0x248] sm:$0xff] 0.0
      %119 = vst [vmem:[#allocation2 + $0x250] sm:$0xff] 0.0
      %120 = vst [vmem:[#allocation2 + $0x258] sm:$0xff] 0.0
      %121 = vst [vmem:[#allocation2 + $0x260] sm:$0xff] 0.0
      %122 = vst [vmem:[#allocation2 + $0x268] sm:$0xff] 0.0
      %123 = vst [vmem:[#allocation2 + $0x270] sm:$0xff] 0.0
      %124 = vst [vmem:[#allocation2 + $0x278] sm:$0xff] 0.0
      %125 = vst [vmem:[#allocation2 + $0x280] sm:$0xff] 0.0
      %126 = vst [vmem:[#allocation2 + $0x288] sm:$0xff] 0.0
      %127 = vst [vmem:[#allocation2 + $0x290] sm:$0xff] 0.0
      %128 = vst [vmem:[#allocation2 + $0x298] sm:$0xff] 0.0
      %129 = vst [vmem:[#allocation2 + $0x2a0] sm:$0xff] 0.0
      %130 = vst [vmem:[#allocation2 + $0x2a8] sm:$0xff] 0.0
      %131 = vst [vmem:[#allocation2 + $0x2b0] sm:$0xff] 0.0
      %132 = vst [vmem:[#allocation2 + $0x2b8] sm:$0xff] 0.0
      %133 = vst [vmem:[#allocation2 + $0x2c0] sm:$0xff] 0.0
      %134 = vst [vmem:[#allocation2 + $0x2c8] sm:$0xff] 0.0
      %135 = vst [vmem:[#allocation2 + $0x2d0] sm:$0xff] 0.0
      %136 = vst [vmem:[#allocation2 + $0x2d8] sm:$0xff] 0.0
      %137 = vst [vmem:[#allocation2 + $0x2e0] sm:$0xff] 0.0
      %138 = vst [vmem:[#allocation2 + $0x2e8] sm:$0xff] 0.0
      %139 = vst [vmem:[#allocation2 + $0x2f0] sm:$0xff] 0.0
      %140 = vst [vmem:[#allocation2 + $0x2f8] sm:$0xff] 0.0
      %141 = vst [vmem:[#allocation2 + $0x300] sm:$0xff] 0.0
      %142 = vst [vmem:[#allocation2 + $0x308] sm:$0xff] 0.0
      %143 = vst [vmem:[#allocation2 + $0x310] sm:$0xff] 0.0
      %144 = vst [vmem:[#allocation2 + $0x318] sm:$0xff] 0.0
      %145 = vst [vmem:[#allocation2 + $0x320] sm:$0xff] 0.0
      %146 = vst [vmem:[#allocation2 + $0x328] sm:$0xff] 0.0
      %147 = vst [vmem:[#allocation2 + $0x330] sm:$0xff] 0.0
      %148 = vst [vmem:[#allocation2 + $0x338] sm:$0xff] 0.0
      %149 = vst [vmem:[#allocation2 + $0x340] sm:$0xff] 0.0
      %150 = vst [vmem:[#allocation2 + $0x348] sm:$0xff] 0.0
      %151 = vst [vmem:[#allocation2 + $0x350] sm:$0xff] 0.0
      %152 = vst [vmem:[#allocation2 + $0x358] sm:$0xff] 0.0
      %153 = vst [vmem:[#allocation2 + $0x360] sm:$0xff] 0.0
      %154 = vst [vmem:[#allocation2 + $0x368] sm:$0xff] 0.0
      %155 = vst [vmem:[#allocation2 + $0x370] sm:$0xff] 0.0
      %156 = vst [vmem:[#allocation2 + $0x378] sm:$0xff] 0.0
      %157 = vst [vmem:[#allocation2 + $0x380] sm:$0xff] 0.0
      %158 = vst [vmem:[#allocation2 + $0x388] sm:$0xff] 0.0
      %159 = vst [vmem:[#allocation2 + $0x390] sm:$0xff] 0.0
      %160 = vst [vmem:[#allocation2 + $0x398] sm:$0xff] 0.0
      %161 = vst [vmem:[#allocation2 + $0x3a0] sm:$0xff] 0.0
      %162 = vst [vmem:[#allocation2 + $0x3a8] sm:$0xff] 0.0
      %163 = vst [vmem:[#allocation2 + $0x3b0] sm:$0xff] 0.0
      %164 = vst [vmem:[#allocation2 + $0x3b8] sm:$0xff] 0.0
      %165 = vst [vmem:[#allocation2 + $0x3c0] sm:$0xff] 0.0
      %166 = vst [vmem:[#allocation2 + $0x3c8] sm:$0xff] 0.0
      %167 = vst [vmem:[#allocation2 + $0x3d0] sm:$0xff] 0.0
      %168 = vst [vmem:[#allocation2 + $0x3d8] sm:$0xff] 0.0
      %169 = vst [vmem:[#allocation2 + $0x3e0] sm:$0xff] 0.0
      %170 = vst [vmem:[#allocation2 + $0x3e8] sm:$0xff] 0.0
      %171 = vst [vmem:[#allocation2 + $0x3f0] sm:$0xff] 0.0
      %172 = vst [vmem:[#allocation2 + $0x3f8] sm:$0xff] 0.0
      %173 = vst [vmem:[#allocation2 + $0x400] sm:$0xff] 0.0
      %174 = vst [vmem:[#allocation2 + $0x408] sm:$0xff] 0.0
      %175 = vst [vmem:[#allocation2 + $0x410] sm:$0xff] 0.0
      %176 = vst [vmem:[#allocation2 + $0x418] sm:$0xff] 0.0
      %177 = vst [vmem:[#allocation2 + $0x420] sm:$0xff] 0.0
      %178 = vst [vmem:[#allocation2 + $0x428] sm:$0xff] 0.0
      %179 = vst [vmem:[#allocation2 + $0x430] sm:$0xff] 0.0
      %180 = vst [vmem:[#allocation2 + $0x438] sm:$0xff] 0.0
      %181 = vst [vmem:[#allocation2 + $0x440] sm:$0xff] 0.0
      %182 = vst [vmem:[#allocation2 + $0x448] sm:$0xff] 0.0
      %183 = vst [vmem:[#allocation2 + $0x450] sm:$0xff] 0.0
      %184 = vst [vmem:[#allocation2 + $0x458] sm:$0xff] 0.0
      %185 = vst [vmem:[#allocation2 + $0x460] sm:$0xff] 0.0
      %186 = vst [vmem:[#allocation2 + $0x468] sm:$0xff] 0.0
      %187 = vst [vmem:[#allocation2 + $0x470] sm:$0xff] 0.0
      %188 = vst [vmem:[#allocation2 + $0x478] sm:$0xff] 0.0
      %189 = vst [vmem:[#allocation2 + $0x480] sm:$0xff] 0.0
      %190 = vst [vmem:[#allocation2 + $0x488] sm:$0xff] 0.0
      %191 = vst [vmem:[#allocation2 + $0x490] sm:$0xff] 0.0
      %192 = vst [vmem:[#allocation2 + $0x498] sm:$0xff] 0.0
      %193 = vst [vmem:[#allocation2 + $0x4a0] sm:$0xff] 0.0
      %194 = vst [vmem:[#allocation2 + $0x4a8] sm:$0xff] 0.0
      %195 = vst [vmem:[#allocation2 + $0x4b0] sm:$0xff] 0.0
      %196 = vst [vmem:[#allocation2 + $0x4b8] sm:$0xff] 0.0
      %197 = vst [vmem:[#allocation2 + $0x4c0] sm:$0xff] 0.0
      %198 = vst [vmem:[#allocation2 + $0x4c8] sm:$0xff] 0.0
      %199 = vst [vmem:[#allocation2 + $0x4d0] sm:$0xff] 0.0
      %200 = vst [vmem:[#allocation2 + $0x4d8] sm:$0xff] 0.0
      %201 = vst [vmem:[#allocation2 + $0x4e0] sm:$0xff] 0.0
      %202 = vst [vmem:[#allocation2 + $0x4e8] sm:$0xff] 0.0
      %203 = vst [vmem:[#allocation2 + $0x4f0] sm:$0xff] 0.0
      %204 = vst [vmem:[#allocation2 + $0x4f8] sm:$0xff] 0.0
      %205 = vst [vmem:[#allocation2 + $0x500] sm:$0xff] 0.0
      %206 = vst [vmem:[#allocation2 + $0x508] sm:$0xff] 0.0
      %207 = vst [vmem:[#allocation2 + $0x510] sm:$0xff] 0.0
      %208 = vst [vmem:[#allocation2 + $0x518] sm:$0xff] 0.0
      %209 = vst [vmem:[#allocation2 + $0x520] sm:$0xff] 0.0
      %210 = vst [vmem:[#allocation2 + $0x528] sm:$0xff] 0.0
      %211 = vst [vmem:[#allocation2 + $0x530] sm:$0xff] 0.0
      %212 = vst [vmem:[#allocation2 + $0x538] sm:$0xff] 0.0
      %213 = vst [vmem:[#allocation2 + $0x540] sm:$0xff] 0.0
      %214 = vst [vmem:[#allocation2 + $0x548] sm:$0xff] 0.0
      %215 = vst [vmem:[#allocation2 + $0x550] sm:$0xff] 0.0
      %216 = vst [vmem:[#allocation2 + $0x558] sm:$0xff] 0.0
      %217 = vst [vmem:[#allocation2 + $0x560] sm:$0xff] 0.0
      %218 = vst [vmem:[#allocation2 + $0x568] sm:$0xff] 0.0
      %219 = vst [vmem:[#allocation2 + $0x570] sm:$0xff] 0.0
      %220 = vst [vmem:[#allocation2 + $0x578] sm:$0xff] 0.0
      %221 = vst [vmem:[#allocation2 + $0x580] sm:$0xff] 0.0
      %222 = vst [vmem:[#allocation2 + $0x588] sm:$0xff] 0.0
      %223 = vst [vmem:[#allocation2 + $0x590] sm:$0xff] 0.0
      %224 = vst [vmem:[#allocation2 + $0x598] sm:$0xff] 0.0
      %225 = vst [vmem:[#allocation2 + $0x5a0] sm:$0xff] 0.0
      %226 = vst [vmem:[#allocation2 + $0x5a8] sm:$0xff] 0.0
      %227 = vst [vmem:[#allocation2 + $0x5b0] sm:$0xff] 0.0
      %228 = vst [vmem:[#allocation2 + $0x5b8] sm:$0xff] 0.0
      %229 = vst [vmem:[#allocation2 + $0x5c0] sm:$0xff] 0.0
      %230 = vst [vmem:[#allocation2 + $0x5c8] sm:$0xff] 0.0
      %231 = vst [vmem:[#allocation2 + $0x5d0] sm:$0xff] 0.0
      %232 = vst [vmem:[#allocation2 + $0x5d8] sm:$0xff] 0.0
      %233 = vst [vmem:[#allocation2 + $0x5e0] sm:$0xff] 0.0
      %234 = vst [vmem:[#allocation2 + $0x5e8] sm:$0xff] 0.0
      %235 = vst [vmem:[#allocation2 + $0x5f0] sm:$0xff] 0.0
      %236 = vst [vmem:[#allocation2 + $0x5f8] sm:$0xff] 0.0
    $region25: #{tpu_custom_call.1} parent=1 // pred_fallthru
      _
    loop: start=0, step=1, limit=4
    $region26: #{tpu_custom_call.1} parent=1 // loop_pre_header
      _
    $region27: #{tpu_custom_call.1} parent=1 // loop_header
      %s238 = sphi 0, %s242
      %p239 = scmp.ge.s32.totalorder %s238, 4
    $region28: #{tpu_custom_call.1} parent=1 // loop_header_branch
      %241 = sbr.rel (%p239) target = $region32
    $region29: #{tpu_custom_call.1} parent=1 // loop_body
      %s243 = smul.u32 %s238, 128
      %s244 = sshra.s32 %s243, 7
      %s245 = sand.u32 %s243, 127
      %s246 = smul.addr %s244, 8
      %s247 = scalar_lea.vmem [#allocation3], %s246
      %v248 = vld [vmem:[%s247] sm:$0xff]
      %v249 = vld [vmem:[%s247 + $0x20] sm:$0xff]
      %v250 = vld [vmem:[%s247 + $0x40] sm:$0xff]
      %v251 = vld [vmem:[%s247 + $0x60] sm:$0xff]
      %v252 = vld [vmem:[%s247 + $0x80] sm:$0xf]
      %v253 = vsub.f32 0.0, %v248
      %v254 = vsub.f32 0.0, %v249
      %v255 = vsub.f32 0.0, %v250
      %v256 = vsub.f32 0.0, %v251
      %v257 = vsub.f32 0.0, %v252
      %v258 = vmul.f32 %v253, 1.442695
      %v259 = vpow.pop %v258
      %v260 = vmul.f32 %v254, 1.442695
      %v261 = vpow.pop %v260
      %v262 = vmul.f32 %v255, 1.442695
      %v263 = vpow.pop %v262
      %v264 = vmul.f32 %v256, 1.442695
      %v265 = vpow.pop %v264
      %v266 = vmul.f32 %v257, 1.442695
      %v267 = vpow.pop %v266
      %v268 = vadd.f32 %v259, 1.0
      %v269 = vadd.f32 %v261, 1.0
      %v270 = vadd.f32 %v263, 1.0
      %v271 = vadd.f32 %v265, 1.0
      %v272 = vadd.f32 %v267, 1.0
      %v273 = vrcp.pop %v268
      %v274 = vmul.f32 1.0, %v273
      %v275 = vrcp.pop %v269
      %v276 = vmul.f32 1.0, %v275
      %v277 = vrcp.pop %v270
      %v278 = vmul.f32 1.0, %v277
      %v279 = vrcp.pop %v271
      %v280 = vmul.f32 1.0, %v279
      %v281 = vrcp.pop %v272
      %v282 = vmul.f32 1.0, %v281
      %v283 = vmul.f32 %v248, %v274
      %v284 = vmul.f32 %v249, %v276
      %v285 = vmul.f32 %v250, %v278
      %v286 = vmul.f32 %v251, %v280
      %v287 = vmul.f32 %v252, %v282
      %s288 = smul.addr %s244, 8
      %s289 = scalar_lea.vmem [#allocation2], %s288
      %290 = vst [vmem:[%s289] sm:$0xff] %v283
      %291 = vst [vmem:[%s289 + $0x20] sm:$0xff] %v284
      %292 = vst [vmem:[%s289 + $0x40] sm:$0xff] %v285
      %293 = vst [vmem:[%s289 + $0x60] sm:$0xff] %v286
      %294 = vst [vmem:[%s289 + $0x80] sm:$0xf] %v287
      %vm295 = vcmp.ge.f32.partialorder %v248, -2.2
      %vm296 = vcmp.ge.f32.partialorder %v249, -2.2
      %vm297 = vcmp.ge.f32.partialorder %v250, -2.2
      %vm298 = vcmp.ge.f32.partialorder %v251, -2.2
      %vm299 = vcmp.ge.f32.partialorder %v252, -2.2
      %vm300 = vcmp.lt.f32.partialorder %v248, -1.8
      %vm301 = vcmp.lt.f32.partialorder %v249, -1.8
      %vm302 = vcmp.lt.f32.partialorder %v250, -1.8
      %vm303 = vcmp.lt.f32.partialorder %v251, -1.8
      %vm304 = vcmp.lt.f32.partialorder %v252, -1.8
      %vm305 = vmand %vm295, %vm300
      %vm306 = vmand %vm296, %vm301
      %vm307 = vmand %vm297, %vm302
      %vm308 = vmand %vm298, %vm303
      %vm309 = vmand %vm299, %vm304
      %v310 = vsel %vm305, 1, 0
      %v311 = vsel %vm306, 1, 0
      %v312 = vsel %vm307, 1, 0
      %v313 = vsel %vm308, 1, 0
      %v314 = vsel %vm309, 1, 0
      %v315 = vcvt.s32.f32 %v310
      %v316 = vcvt.s32.f32 %v311
      %v317 = vcvt.s32.f32 %v312
      %v318 = vcvt.s32.f32 %v313
      %v319 = vcvt.s32.f32 %v314
      %vm320 = vcmp.ge.f32.partialorder %v248, -1.8
      %vm321 = vcmp.ge.f32.partialorder %v249, -1.8
      %vm322 = vcmp.ge.f32.partialorder %v250, -1.8
      %vm323 = vcmp.ge.f32.partialorder %v251, -1.8
      %vm324 = vcmp.ge.f32.partialorder %v252, -1.8
      %vm325 = vcmp.lt.f32.partialorder %v248, -1.4
      %vm326 = vcmp.lt.f32.partialorder %v249, -1.4
      %vm327 = vcmp.lt.f32.partialorder %v250, -1.4
      %vm328 = vcmp.lt.f32.partialorder %v251, -1.4
      %vm329 = vcmp.lt.f32.partialorder %v252, -1.4
      %vm330 = vmand %vm320, %vm325
      %vm331 = vmand %vm321, %vm326
      %vm332 = vmand %vm322, %vm327
      %vm333 = vmand %vm323, %vm328
      %vm334 = vmand %vm324, %vm329
      %v335 = vsel %vm330, 1, 0
      %v336 = vsel %vm331, 1, 0
      %v337 = vsel %vm332, 1, 0
      %v338 = vsel %vm333, 1, 0
      %v339 = vsel %vm334, 1, 0
      %v340 = vcvt.s32.f32 %v335
      %v341 = vcvt.s32.f32 %v336
      %v342 = vcvt.s32.f32 %v337
      %v343 = vcvt.s32.f32 %v338
      %v344 = vcvt.s32.f32 %v339
      %vm345 = vcmp.ge.f32.partialorder %v248, -1.4
      %vm346 = vcmp.ge.f32.partialorder %v249, -1.4
      %vm347 = vcmp.ge.f32.partialorder %v250, -1.4
      %vm348 = vcmp.ge.f32.partialorder %v251, -1.4
      %vm349 = vcmp.ge.f32.partialorder %v252, -1.4
      %vm350 = vcmp.lt.f32.partialorder %v248, -1.0
      %vm351 = vcmp.lt.f32.partialorder %v249, -1.0
      %vm352 = vcmp.lt.f32.partialorder %v250, -1.0
      %vm353 = vcmp.lt.f32.partialorder %v251, -1.0
      %vm354 = vcmp.lt.f32.partialorder %v252, -1.0
      %vm355 = vmand %vm345, %vm350
      %vm356 = vmand %vm346, %vm351
      %vm357 = vmand %vm347, %vm352
      %vm358 = vmand %vm348, %vm353
      %vm359 = vmand %vm349, %vm354
      %v360 = vsel %vm355, 1, 0
      %v361 = vsel %vm356, 1, 0
      %v362 = vsel %vm357, 1, 0
      %v363 = vsel %vm358, 1, 0
      %v364 = vsel %vm359, 1, 0
      %v365 = vcvt.s32.f32 %v360
      %v366 = vcvt.s32.f32 %v361
      %v367 = vcvt.s32.f32 %v362
      %v368 = vcvt.s32.f32 %v363
      %v369 = vcvt.s32.f32 %v364
      %vm370 = vcmp.ge.f32.partialorder %v248, -1.0
      %vm371 = vcmp.ge.f32.partialorder %v249, -1.0
      %vm372 = vcmp.ge.f32.partialorder %v250, -1.0
      %vm373 = vcmp.ge.f32.partialorder %v251, -1.0
      %vm374 = vcmp.ge.f32.partialorder %v252, -1.0
      %vm375 = vcmp.lt.f32.partialorder %v248, -0.6
      %vm376 = vcmp.lt.f32.partialorder %v249, -0.6
      %vm377 = vcmp.lt.f32.partialorder %v250, -0.6
      %vm378 = vcmp.lt.f32.partialorder %v251, -0.6
      %vm379 = vcmp.lt.f32.partialorder %v252, -0.6
      %vm380 = vmand %vm370, %vm375
      %vm381 = vmand %vm371, %vm376
      %vm382 = vmand %vm372, %vm377
      %vm383 = vmand %vm373, %vm378
      %vm384 = vmand %vm374, %vm379
      %v385 = vsel %vm380, 1, 0
      %v386 = vsel %vm381, 1, 0
      %v387 = vsel %vm382, 1, 0
      %v388 = vsel %vm383, 1, 0
      %v389 = vsel %vm384, 1, 0
      %v390 = vcvt.s32.f32 %v385
      %v391 = vcvt.s32.f32 %v386
      %v392 = vcvt.s32.f32 %v387
      %v393 = vcvt.s32.f32 %v388
      %v394 = vcvt.s32.f32 %v389
      %vm395 = vcmp.ge.f32.partialorder %v248, -0.6
      %vm396 = vcmp.ge.f32.partialorder %v249, -0.6
      %vm397 = vcmp.ge.f32.partialorder %v250, -0.6
      %vm398 = vcmp.ge.f32.partialorder %v251, -0.6
      %vm399 = vcmp.ge.f32.partialorder %v252, -0.6
      %vm400 = vcmp.lt.f32.partialorder %v248, -0.2
      %vm401 = vcmp.lt.f32.partialorder %v249, -0.2
      %vm402 = vcmp.lt.f32.partialorder %v250, -0.2
      %vm403 = vcmp.lt.f32.partialorder %v251, -0.2
      %vm404 = vcmp.lt.f32.partialorder %v252, -0.2
      %vm405 = vmand %vm395, %vm400
      %vm406 = vmand %vm396, %vm401
      %vm407 = vmand %vm397, %vm402
      %vm408 = vmand %vm398, %vm403
      %vm409 = vmand %vm399, %vm404
      %v410 = vsel %vm405, 1, 0
      %v411 = vsel %vm406, 1, 0
      %v412 = vsel %vm407, 1, 0
      %v413 = vsel %vm408, 1, 0
      %v414 = vsel %vm409, 1, 0
      %v415 = vcvt.s32.f32 %v410
      %v416 = vcvt.s32.f32 %v411
      %v417 = vcvt.s32.f32 %v412
      %v418 = vcvt.s32.f32 %v413
      %v419 = vcvt.s32.f32 %v414
      %vm420 = vcmp.ge.f32.partialorder %v248, -0.2
      %vm421 = vcmp.ge.f32.partialorder %v249, -0.2
      %vm422 = vcmp.ge.f32.partialorder %v250, -0.2
      %vm423 = vcmp.ge.f32.partialorder %v251, -0.2
      %vm424 = vcmp.ge.f32.partialorder %v252, -0.2
      %vm425 = vcmp.lt.f32.partialorder %v248, 0.2
      %vm426 = vcmp.lt.f32.partialorder %v249, 0.2
      %vm427 = vcmp.lt.f32.partialorder %v250, 0.2
      %vm428 = vcmp.lt.f32.partialorder %v251, 0.2
      %vm429 = vcmp.lt.f32.partialorder %v252, 0.2
      %vm430 = vmand %vm420, %vm425
      %vm431 = vmand %vm421, %vm426
      %vm432 = vmand %vm422, %vm427
      %vm433 = vmand %vm423, %vm428
      %vm434 = vmand %vm424, %vm429
      %v435 = vsel %vm430, 1, 0
      %v436 = vsel %vm431, 1, 0
      %v437 = vsel %vm432, 1, 0
      %v438 = vsel %vm433, 1, 0
      %v439 = vsel %vm434, 1, 0
      %v440 = vcvt.s32.f32 %v435
      %v441 = vcvt.s32.f32 %v436
      %v442 = vcvt.s32.f32 %v437
      %v443 = vcvt.s32.f32 %v438
      %v444 = vcvt.s32.f32 %v439
      %vm445 = vcmp.ge.f32.partialorder %v248, 0.2
      %vm446 = vcmp.ge.f32.partialorder %v249, 0.2
      %vm447 = vcmp.ge.f32.partialorder %v250, 0.2
      %vm448 = vcmp.ge.f32.partialorder %v251, 0.2
      %vm449 = vcmp.ge.f32.partialorder %v252, 0.2
      %vm450 = vcmp.lt.f32.partialorder %v248, 0.6
      %vm451 = vcmp.lt.f32.partialorder %v249, 0.6
      %vm452 = vcmp.lt.f32.partialorder %v250, 0.6
      %vm453 = vcmp.lt.f32.partialorder %v251, 0.6
      %vm454 = vcmp.lt.f32.partialorder %v252, 0.6
      %vm455 = vmand %vm445, %vm450
      %vm456 = vmand %vm446, %vm451
      %vm457 = vmand %vm447, %vm452
      %vm458 = vmand %vm448, %vm453
      %vm459 = vmand %vm449, %vm454
      %v460 = vsel %vm455, 1, 0
      %v461 = vsel %vm456, 1, 0
      %v462 = vsel %vm457, 1, 0
      %v463 = vsel %vm458, 1, 0
      %v464 = vsel %vm459, 1, 0
      %v465 = vcvt.s32.f32 %v460
      %v466 = vcvt.s32.f32 %v461
      %v467 = vcvt.s32.f32 %v462
      %v468 = vcvt.s32.f32 %v463
      %v469 = vcvt.s32.f32 %v464
      %vm470 = vcmp.ge.f32.partialorder %v248, 0.6
      %vm471 = vcmp.ge.f32.partialorder %v249, 0.6
      %vm472 = vcmp.ge.f32.partialorder %v250, 0.6
      %vm473 = vcmp.ge.f32.partialorder %v251, 0.6
      %vm474 = vcmp.ge.f32.partialorder %v252, 0.6
      %vm475 = vcmp.lt.f32.partialorder %v248, 1.0
      %vm476 = vcmp.lt.f32.partialorder %v249, 1.0
      %vm477 = vcmp.lt.f32.partialorder %v250, 1.0
      %vm478 = vcmp.lt.f32.partialorder %v251, 1.0
      %vm479 = vcmp.lt.f32.partialorder %v252, 1.0
      %vm480 = vmand %vm470, %vm475
      %vm481 = vmand %vm471, %vm476
      %vm482 = vmand %vm472, %vm477
      %vm483 = vmand %vm473, %vm478
      %vm484 = vmand %vm474, %vm479
      %v485 = vsel %vm480, 1, 0
      %v486 = vsel %vm481, 1, 0
      %v487 = vsel %vm482, 1, 0
      %v488 = vsel %vm483, 1, 0
      %v489 = vsel %vm484, 1, 0
      %v490 = vcvt.s32.f32 %v485
      %v491 = vcvt.s32.f32 %v486
      %v492 = vcvt.s32.f32 %v487
      %v493 = vcvt.s32.f32 %v488
      %v494 = vcvt.s32.f32 %v489
      %vm495 = vcmp.ge.f32.partialorder %v248, 1.0
      %vm496 = vcmp.ge.f32.partialorder %v249, 1.0
      %vm497 = vcmp.ge.f32.partialorder %v250, 1.0
      %vm498 = vcmp.ge.f32.partialorder %v251, 1.0
      %vm499 = vcmp.ge.f32.partialorder %v252, 1.0
      %vm500 = vcmp.lt.f32.partialorder %v248, 1.4
      %vm501 = vcmp.lt.f32.partialorder %v249, 1.4
      %vm502 = vcmp.lt.f32.partialorder %v250, 1.4
      %vm503 = vcmp.lt.f32.partialorder %v251, 1.4
      %vm504 = vcmp.lt.f32.partialorder %v252, 1.4
      %vm505 = vmand %vm495, %vm500
      %vm506 = vmand %vm496, %vm501
      %vm507 = vmand %vm497, %vm502
      %vm508 = vmand %vm498, %vm503
      %vm509 = vmand %vm499, %vm504
      %v510 = vsel %vm505, 1, 0
      %v511 = vsel %vm506, 1, 0
      %v512 = vsel %vm507, 1, 0
      %v513 = vsel %vm508, 1, 0
      %v514 = vsel %vm509, 1, 0
      %v515 = vcvt.s32.f32 %v510
      %v516 = vcvt.s32.f32 %v511
      %v517 = vcvt.s32.f32 %v512
      %v518 = vcvt.s32.f32 %v513
      %v519 = vcvt.s32.f32 %v514
      %vm520 = vcmp.ge.f32.partialorder %v248, 1.4
      %vm521 = vcmp.ge.f32.partialorder %v249, 1.4
      %vm522 = vcmp.ge.f32.partialorder %v250, 1.4
      %vm523 = vcmp.ge.f32.partialorder %v251, 1.4
      %vm524 = vcmp.ge.f32.partialorder %v252, 1.4
      %vm525 = vcmp.lt.f32.partialorder %v248, 1.8
      %vm526 = vcmp.lt.f32.partialorder %v249, 1.8
      %vm527 = vcmp.lt.f32.partialorder %v250, 1.8
      %vm528 = vcmp.lt.f32.partialorder %v251, 1.8
      %vm529 = vcmp.lt.f32.partialorder %v252, 1.8
      %vm530 = vmand %vm520, %vm525
      %vm531 = vmand %vm521, %vm526
      %vm532 = vmand %vm522, %vm527
      %vm533 = vmand %vm523, %vm528
      %vm534 = vmand %vm524, %vm529
      %v535 = vsel %vm530, 1, 0
      %v536 = vsel %vm531, 1, 0
      %v537 = vsel %vm532, 1, 0
      %v538 = vsel %vm533, 1, 0
      %v539 = vsel %vm534, 1, 0
      %v540 = vcvt.s32.f32 %v535
      %v541 = vcvt.s32.f32 %v536
      %v542 = vcvt.s32.f32 %v537
      %v543 = vcvt.s32.f32 %v538
      %v544 = vcvt.s32.f32 %v539
      %vm545 = vcmp.ge.f32.partialorder %v248, 1.8
      %vm546 = vcmp.ge.f32.partialorder %v249, 1.8
      %vm547 = vcmp.ge.f32.partialorder %v250, 1.8
      %vm548 = vcmp.ge.f32.partialorder %v251, 1.8
      %vm549 = vcmp.ge.f32.partialorder %v252, 1.8
      %vm550 = vcmp.lt.f32.partialorder %v248, 2.2
      %vm551 = vcmp.lt.f32.partialorder %v249, 2.2
      %vm552 = vcmp.lt.f32.partialorder %v250, 2.2
      %vm553 = vcmp.lt.f32.partialorder %v251, 2.2
      %vm554 = vcmp.lt.f32.partialorder %v252, 2.2
      %vm555 = vmand %vm545, %vm550
      %vm556 = vmand %vm546, %vm551
      %vm557 = vmand %vm547, %vm552
      %vm558 = vmand %vm548, %vm553
      %vm559 = vmand %vm549, %vm554
      %v560 = vsel %vm555, 1, 0
      %v561 = vsel %vm556, 1, 0
      %v562 = vsel %vm557, 1, 0
      %v563 = vsel %vm558, 1, 0
      %v564 = vsel %vm559, 1, 0
      %v565 = vcvt.s32.f32 %v560
      %v566 = vcvt.s32.f32 %v561
      %v567 = vcvt.s32.f32 %v562
      %v568 = vcvt.s32.f32 %v563
      %v569 = vcvt.s32.f32 %v564
      %v570 = vsub.f32 %v248, -2.2
      %v571 = vsub.f32 %v249, -2.2
      %v572 = vsub.f32 %v250, -2.2
      %v573 = vsub.f32 %v251, -2.2
      %v574 = vsub.f32 %v252, -2.2
      %v575 = vmul.f32 %v570, 2.5
      %v576 = vmul.f32 %v571, 2.5
      %v577 = vmul.f32 %v572, 2.5
      %v578 = vmul.f32 %v573, 2.5
      %v579 = vmul.f32 %v574, 2.5
      %v580 = vmul.f32 %v575, %v315
      %v581 = vmul.f32 %v576, %v316
      %v582 = vmul.f32 %v577, %v317
      %v583 = vmul.f32 %v578, %v318
      %v584 = vmul.f32 %v579, %v319
      %v585 = vsub.f32 -1.4, %v248
      %v586 = vsub.f32 -1.4, %v249
      %v587 = vsub.f32 -1.4, %v250
      %v588 = vsub.f32 -1.4, %v251
      %v589 = vsub.f32 -1.4, %v252
      %v590 = vmul.f32 %v585, 2.5
      %v591 = vmul.f32 %v586, 2.5
      %v592 = vmul.f32 %v587, 2.5
      %v593 = vmul.f32 %v588, 2.5
      %v594 = vmul.f32 %v589, 2.5
      %v595 = vmul.f32 %v590, %v340
      %v596 = vmul.f32 %v591, %v341
      %v597 = vmul.f32 %v592, %v342
      %v598 = vmul.f32 %v593, %v343
      %v599 = vmul.f32 %v594, %v344
      %v600 = vadd.f32 %v580, %v595
      %v601 = vadd.f32 %v581, %v596
      %v602 = vadd.f32 %v582, %v597
      %v603 = vadd.f32 %v583, %v598
      %v604 = vadd.f32 %v584, %v599
      %v605 = vsub.f32 %v248, -1.8
      %v606 = vsub.f32 %v249, -1.8
      %v607 = vsub.f32 %v250, -1.8
      %v608 = vsub.f32 %v251, -1.8
      %v609 = vsub.f32 %v252, -1.8
      %v610 = vmul.f32 %v605, 2.5
      %v611 = vmul.f32 %v606, 2.5
      %v612 = vmul.f32 %v607, 2.5
      %v613 = vmul.f32 %v608, 2.5
      %v614 = vmul.f32 %v609, 2.5
      %v615 = vmul.f32 %v610, %v340
      %v616 = vmul.f32 %v611, %v341
      %v617 = vmul.f32 %v612, %v342
      %v618 = vmul.f32 %v613, %v343
      %v619 = vmul.f32 %v614, %v344
      %v620 = vsub.f32 -1.0, %v248
      %v621 = vsub.f32 -1.0, %v249
      %v622 = vsub.f32 -1.0, %v250
      %v623 = vsub.f32 -1.0, %v251
      %v624 = vsub.f32 -1.0, %v252
      %v625 = vmul.f32 %v620, 2.5
      %v626 = vmul.f32 %v621, 2.5
      %v627 = vmul.f32 %v622, 2.5
      %v628 = vmul.f32 %v623, 2.5
      %v629 = vmul.f32 %v624, 2.5
      %v630 = vmul.f32 %v625, %v365
      %v631 = vmul.f32 %v626, %v366
      %v632 = vmul.f32 %v627, %v367
      %v633 = vmul.f32 %v628, %v368
      %v634 = vmul.f32 %v629, %v369
      %v635 = vadd.f32 %v615, %v630
      %v636 = vadd.f32 %v616, %v631
      %v637 = vadd.f32 %v617, %v632
      %v638 = vadd.f32 %v618, %v633
      %v639 = vadd.f32 %v619, %v634
      %v640 = vsub.f32 %v248, -1.4
      %v641 = vsub.f32 %v249, -1.4
      %v642 = vsub.f32 %v250, -1.4
      %v643 = vsub.f32 %v251, -1.4
      %v644 = vsub.f32 %v252, -1.4
      %v645 = vmul.f32 %v640, 2.5
      %v646 = vmul.f32 %v641, 2.5
      %v647 = vmul.f32 %v642, 2.5
      %v648 = vmul.f32 %v643, 2.5
      %v649 = vmul.f32 %v644, 2.5
      %v650 = vmul.f32 %v645, %v365
      %v651 = vmul.f32 %v646, %v366
      %v652 = vmul.f32 %v647, %v367
      %v653 = vmul.f32 %v648, %v368
      %v654 = vmul.f32 %v649, %v369
      %v655 = vsub.f32 -0.6, %v248
      %v656 = vsub.f32 -0.6, %v249
      %v657 = vsub.f32 -0.6, %v250
      %v658 = vsub.f32 -0.6, %v251
      %v659 = vsub.f32 -0.6, %v252
      %v660 = vmul.f32 %v655, 2.5
      %v661 = vmul.f32 %v656, 2.5
      %v662 = vmul.f32 %v657, 2.5
      %v663 = vmul.f32 %v658, 2.5
      %v664 = vmul.f32 %v659, 2.5
      %v665 = vmul.f32 %v660, %v390
      %v666 = vmul.f32 %v661, %v391
      %v667 = vmul.f32 %v662, %v392
      %v668 = vmul.f32 %v663, %v393
      %v669 = vmul.f32 %v664, %v394
      %v670 = vadd.f32 %v650, %v665
      %v671 = vadd.f32 %v651, %v666
      %v672 = vadd.f32 %v652, %v667
      %v673 = vadd.f32 %v653, %v668
      %v674 = vadd.f32 %v654, %v669
      %v675 = vsub.f32 %v248, -1.0
      %v676 = vsub.f32 %v249, -1.0
      %v677 = vsub.f32 %v250, -1.0
      %v678 = vsub.f32 %v251, -1.0
      %v679 = vsub.f32 %v252, -1.0
      %v680 = vmul.f32 %v675, 2.5
      %v681 = vmul.f32 %v676, 2.5
      %v682 = vmul.f32 %v677, 2.5
      %v683 = vmul.f32 %v678, 2.5
      %v684 = vmul.f32 %v679, 2.5
      %v685 = vmul.f32 %v680, %v390
      %v686 = vmul.f32 %v681, %v391
      %v687 = vmul.f32 %v682, %v392
      %v688 = vmul.f32 %v683, %v393
      %v689 = vmul.f32 %v684, %v394
      %v690 = vsub.f32 -0.2, %v248
      %v691 = vsub.f32 -0.2, %v249
      %v692 = vsub.f32 -0.2, %v250
      %v693 = vsub.f32 -0.2, %v251
      %v694 = vsub.f32 -0.2, %v252
      %v695 = vmul.f32 %v690, 2.5
      %v696 = vmul.f32 %v691, 2.5
      %v697 = vmul.f32 %v692, 2.5
      %v698 = vmul.f32 %v693, 2.5
      %v699 = vmul.f32 %v694, 2.5
      %v700 = vmul.f32 %v695, %v415
      %v701 = vmul.f32 %v696, %v416
      %v702 = vmul.f32 %v697, %v417
      %v703 = vmul.f32 %v698, %v418
      %v704 = vmul.f32 %v699, %v419
      %v705 = vadd.f32 %v685, %v700
      %v706 = vadd.f32 %v686, %v701
      %v707 = vadd.f32 %v687, %v702
      %v708 = vadd.f32 %v688, %v703
      %v709 = vadd.f32 %v689, %v704
      %v710 = vsub.f32 %v248, -0.6
      %v711 = vsub.f32 %v249, -0.6
      %v712 = vsub.f32 %v250, -0.6
      %v713 = vsub.f32 %v251, -0.6
      %v714 = vsub.f32 %v252, -0.6
      %v715 = vmul.f32 %v710, 2.5
      %v716 = vmul.f32 %v711, 2.5
      %v717 = vmul.f32 %v712, 2.5
      %v718 = vmul.f32 %v713, 2.5
      %v719 = vmul.f32 %v714, 2.5
      %v720 = vmul.f32 %v715, %v415
      %v721 = vmul.f32 %v716, %v416
      %v722 = vmul.f32 %v717, %v417
      %v723 = vmul.f32 %v718, %v418
      %v724 = vmul.f32 %v719, %v419
      %v725 = vsub.f32 0.2, %v248
      %v726 = vsub.f32 0.2, %v249
      %v727 = vsub.f32 0.2, %v250
      %v728 = vsub.f32 0.2, %v251
      %v729 = vsub.f32 0.2, %v252
      %v730 = vmul.f32 %v725, 2.5
      %v731 = vmul.f32 %v726, 2.5
      %v732 = vmul.f32 %v727, 2.5
      %v733 = vmul.f32 %v728, 2.5
      %v734 = vmul.f32 %v729, 2.5
      %v735 = vmul.f32 %v730, %v440
      %v736 = vmul.f32 %v731, %v441
      %v737 = vmul.f32 %v732, %v442
      %v738 = vmul.f32 %v733, %v443
      %v739 = vmul.f32 %v734, %v444
      %v740 = vadd.f32 %v720, %v735
      %v741 = vadd.f32 %v721, %v736
      %v742 = vadd.f32 %v722, %v737
      %v743 = vadd.f32 %v723, %v738
      %v744 = vadd.f32 %v724, %v739
      %v745 = vsub.f32 %v248, -0.2
      %v746 = vsub.f32 %v249, -0.2
      %v747 = vsub.f32 %v250, -0.2
      %v748 = vsub.f32 %v251, -0.2
      %v749 = vsub.f32 %v252, -0.2
      %v750 = vmul.f32 %v745, 2.5
      %v751 = vmul.f32 %v746, 2.5
      %v752 = vmul.f32 %v747, 2.5
      %v753 = vmul.f32 %v748, 2.5
      %v754 = vmul.f32 %v749, 2.5
      %v755 = vmul.f32 %v750, %v440
      %v756 = vmul.f32 %v751, %v441
      %v757 = vmul.f32 %v752, %v442
      %v758 = vmul.f32 %v753, %v443
      %v759 = vmul.f32 %v754, %v444
      %v760 = vsub.f32 0.6, %v248
      %v761 = vsub.f32 0.6, %v249
      %v762 = vsub.f32 0.6, %v250
      %v763 = vsub.f32 0.6, %v251
      %v764 = vsub.f32 0.6, %v252
      %v765 = vmul.f32 %v760, 2.5
      %v766 = vmul.f32 %v761, 2.5
      %v767 = vmul.f32 %v762, 2.5
      %v768 = vmul.f32 %v763, 2.5
      %v769 = vmul.f32 %v764, 2.5
      %v770 = vmul.f32 %v765, %v465
      %v771 = vmul.f32 %v766, %v466
      %v772 = vmul.f32 %v767, %v467
      %v773 = vmul.f32 %v768, %v468
      %v774 = vmul.f32 %v769, %v469
      %v775 = vadd.f32 %v755, %v770
      %v776 = vadd.f32 %v756, %v771
      %v777 = vadd.f32 %v757, %v772
      %v778 = vadd.f32 %v758, %v773
      %v779 = vadd.f32 %v759, %v774
      %v780 = vsub.f32 %v248, 0.2
      %v781 = vsub.f32 %v249, 0.2
      %v782 = vsub.f32 %v250, 0.2
      %v783 = vsub.f32 %v251, 0.2
      %v784 = vsub.f32 %v252, 0.2
      %v785 = vmul.f32 %v780, 2.5
      %v786 = vmul.f32 %v781, 2.5
      %v787 = vmul.f32 %v782, 2.5
      %v788 = vmul.f32 %v783, 2.5
      %v789 = vmul.f32 %v784, 2.5
      %v790 = vmul.f32 %v785, %v465
      %v791 = vmul.f32 %v786, %v466
      %v792 = vmul.f32 %v787, %v467
      %v793 = vmul.f32 %v788, %v468
      %v794 = vmul.f32 %v789, %v469
      %v795 = vsub.f32 1.0, %v248
      %v796 = vsub.f32 1.0, %v249
      %v797 = vsub.f32 1.0, %v250
      %v798 = vsub.f32 1.0, %v251
      %v799 = vsub.f32 1.0, %v252
      %v800 = vmul.f32 %v795, 2.5
      %v801 = vmul.f32 %v796, 2.5
      %v802 = vmul.f32 %v797, 2.5
      %v803 = vmul.f32 %v798, 2.5
      %v804 = vmul.f32 %v799, 2.5
      %v805 = vmul.f32 %v800, %v490
      %v806 = vmul.f32 %v801, %v491
      %v807 = vmul.f32 %v802, %v492
      %v808 = vmul.f32 %v803, %v493
      %v809 = vmul.f32 %v804, %v494
      %v810 = vadd.f32 %v790, %v805
      %v811 = vadd.f32 %v791, %v806
      %v812 = vadd.f32 %v792, %v807
      %v813 = vadd.f32 %v793, %v808
      %v814 = vadd.f32 %v794, %v809
      %v815 = vsub.f32 %v248, 0.6
      %v816 = vsub.f32 %v249, 0.6
      %v817 = vsub.f32 %v250, 0.6
      %v818 = vsub.f32 %v251, 0.6
      %v819 = vsub.f32 %v252, 0.6
      %v820 = vmul.f32 %v815, 2.5
      %v821 = vmul.f32 %v816, 2.5
      %v822 = vmul.f32 %v817, 2.5
      %v823 = vmul.f32 %v818, 2.5
      %v824 = vmul.f32 %v819, 2.5
      %v825 = vmul.f32 %v820, %v490
      %v826 = vmul.f32 %v821, %v491
      %v827 = vmul.f32 %v822, %v492
      %v828 = vmul.f32 %v823, %v493
      %v829 = vmul.f32 %v824, %v494
      %v830 = vsub.f32 1.4, %v248
      %v831 = vsub.f32 1.4, %v249
      %v832 = vsub.f32 1.4, %v250
      %v833 = vsub.f32 1.4, %v251
      %v834 = vsub.f32 1.4, %v252
      %v835 = vmul.f32 %v830, 2.5
      %v836 = vmul.f32 %v831, 2.5
      %v837 = vmul.f32 %v832, 2.5
      %v838 = vmul.f32 %v833, 2.5
      %v839 = vmul.f32 %v834, 2.5
      %v840 = vmul.f32 %v835, %v515
      %v841 = vmul.f32 %v836, %v516
      %v842 = vmul.f32 %v837, %v517
      %v843 = vmul.f32 %v838, %v518
      %v844 = vmul.f32 %v839, %v519
      %v845 = vadd.f32 %v825, %v840
      %v846 = vadd.f32 %v826, %v841
      %v847 = vadd.f32 %v827, %v842
      %v848 = vadd.f32 %v828, %v843
      %v849 = vadd.f32 %v829, %v844
      %v850 = vsub.f32 %v248, 1.0
      %v851 = vsub.f32 %v249, 1.0
      %v852 = vsub.f32 %v250, 1.0
      %v853 = vsub.f32 %v251, 1.0
      %v854 = vsub.f32 %v252, 1.0
      %v855 = vmul.f32 %v850, 2.5
      %v856 = vmul.f32 %v851, 2.5
      %v857 = vmul.f32 %v852, 2.5
      %v858 = vmul.f32 %v853, 2.5
      %v859 = vmul.f32 %v854, 2.5
      %v860 = vmul.f32 %v855, %v515
      %v861 = vmul.f32 %v856, %v516
      %v862 = vmul.f32 %v857, %v517
      %v863 = vmul.f32 %v858, %v518
      %v864 = vmul.f32 %v859, %v519
      %v865 = vsub.f32 1.8, %v248
      %v866 = vsub.f32 1.8, %v249
      %v867 = vsub.f32 1.8, %v250
      %v868 = vsub.f32 1.8, %v251
      %v869 = vsub.f32 1.8, %v252
      %v870 = vmul.f32 %v865, 2.5
      %v871 = vmul.f32 %v866, 2.5
      %v872 = vmul.f32 %v867, 2.5
      %v873 = vmul.f32 %v868, 2.5
      %v874 = vmul.f32 %v869, 2.5
      %v875 = vmul.f32 %v870, %v540
      %v876 = vmul.f32 %v871, %v541
      %v877 = vmul.f32 %v872, %v542
      %v878 = vmul.f32 %v873, %v543
      %v879 = vmul.f32 %v874, %v544
      %v880 = vadd.f32 %v860, %v875
      %v881 = vadd.f32 %v861, %v876
      %v882 = vadd.f32 %v862, %v877
      %v883 = vadd.f32 %v863, %v878
      %v884 = vadd.f32 %v864, %v879
      %v885 = vsub.f32 %v248, 1.4
      %v886 = vsub.f32 %v249, 1.4
      %v887 = vsub.f32 %v250, 1.4
      %v888 = vsub.f32 %v251, 1.4
      %v889 = vsub.f32 %v252, 1.4
      %v890 = vmul.f32 %v885, 2.5
      %v891 = vmul.f32 %v886, 2.5
      %v892 = vmul.f32 %v887, 2.5
      %v893 = vmul.f32 %v888, 2.5
      %v894 = vmul.f32 %v889, 2.5
      %v895 = vmul.f32 %v890, %v540
      %v896 = vmul.f32 %v891, %v541
      %v897 = vmul.f32 %v892, %v542
      %v898 = vmul.f32 %v893, %v543
      %v899 = vmul.f32 %v894, %v544
      %v900 = vsub.f32 2.2, %v248
      %v901 = vsub.f32 2.2, %v249
      %v902 = vsub.f32 2.2, %v250
      %v903 = vsub.f32 2.2, %v251
      %v904 = vsub.f32 2.2, %v252
      %v905 = vmul.f32 %v900, 2.5
      %v906 = vmul.f32 %v901, 2.5
      %v907 = vmul.f32 %v902, 2.5
      %v908 = vmul.f32 %v903, 2.5
      %v909 = vmul.f32 %v904, 2.5
      %v910 = vmul.f32 %v905, %v565
      %v911 = vmul.f32 %v906, %v566
      %v912 = vmul.f32 %v907, %v567
      %v913 = vmul.f32 %v908, %v568
      %v914 = vmul.f32 %v909, %v569
      %v915 = vadd.f32 %v895, %v910
      %v916 = vadd.f32 %v896, %v911
      %v917 = vadd.f32 %v897, %v912
      %v918 = vadd.f32 %v898, %v913
      %v919 = vadd.f32 %v899, %v914
      %v920 = vmul.f32 %v570, 1.25
      %v921 = vmul.f32 %v571, 1.25
      %v922 = vmul.f32 %v572, 1.25
      %v923 = vmul.f32 %v573, 1.25
      %v924 = vmul.f32 %v574, 1.25
      %v925 = vmul.f32 %v920, %v600
      %v926 = vmul.f32 %v921, %v601
      %v927 = vmul.f32 %v922, %v602
      %v928 = vmul.f32 %v923, %v603
      %v929 = vmul.f32 %v924, %v604
      %v930 = vmul.f32 %v620, 1.25
      %v931 = vmul.f32 %v621, 1.25
      %v932 = vmul.f32 %v622, 1.25
      %v933 = vmul.f32 %v623, 1.25
      %v934 = vmul.f32 %v624, 1.25
      %v935 = vmul.f32 %v930, %v635
      %v936 = vmul.f32 %v931, %v636
      %v937 = vmul.f32 %v932, %v637
      %v938 = vmul.f32 %v933, %v638
      %v939 = vmul.f32 %v934, %v639
      %v940 = vadd.f32 %v925, %v935
      %v941 = vadd.f32 %v926, %v936
      %v942 = vadd.f32 %v927, %v937
      %v943 = vadd.f32 %v928, %v938
      %v944 = vadd.f32 %v929, %v939
      %v945 = vmul.f32 %v605, 1.25
      %v946 = vmul.f32 %v606, 1.25
      %v947 = vmul.f32 %v607, 1.25
      %v948 = vmul.f32 %v608, 1.25
      %v949 = vmul.f32 %v609, 1.25
      %v950 = vmul.f32 %v945, %v635
      %v951 = vmul.f32 %v946, %v636
      %v952 = vmul.f32 %v947, %v637
      %v953 = vmul.f32 %v948, %v638
      %v954 = vmul.f32 %v949, %v639
      %v955 = vmul.f32 %v655, 1.25
      %v956 = vmul.f32 %v656, 1.25
      %v957 = vmul.f32 %v657, 1.25
      %v958 = vmul.f32 %v658, 1.25
      %v959 = vmul.f32 %v659, 1.25
      %v960 = vmul.f32 %v955, %v670
      %v961 = vmul.f32 %v956, %v671
      %v962 = vmul.f32 %v957, %v672
      %v963 = vmul.f32 %v958, %v673
      %v964 = vmul.f32 %v959, %v674
      %v965 = vadd.f32 %v950, %v960
      %v966 = vadd.f32 %v951, %v961
      %v967 = vadd.f32 %v952, %v962
      %v968 = vadd.f32 %v953, %v963
      %v969 = vadd.f32 %v954, %v964
      %v970 = vmul.f32 %v640, 1.25
      %v971 = vmul.f32 %v641, 1.25
      %v972 = vmul.f32 %v642, 1.25
      %v973 = vmul.f32 %v643, 1.25
      %v974 = vmul.f32 %v644, 1.25
      %v975 = vmul.f32 %v970, %v670
      %v976 = vmul.f32 %v971, %v671
      %v977 = vmul.f32 %v972, %v672
      %v978 = vmul.f32 %v973, %v673
      %v979 = vmul.f32 %v974, %v674
      %v980 = vmul.f32 %v690, 1.25
      %v981 = vmul.f32 %v691, 1.25
      %v982 = vmul.f32 %v692, 1.25
      %v983 = vmul.f32 %v693, 1.25
      %v984 = vmul.f32 %v694, 1.25
      %v985 = vmul.f32 %v980, %v705
      %v986 = vmul.f32 %v981, %v706
      %v987 = vmul.f32 %v982, %v707
      %v988 = vmul.f32 %v983, %v708
      %v989 = vmul.f32 %v984, %v709
      %v990 = vadd.f32 %v975, %v985
      %v991 = vadd.f32 %v976, %v986
      %v992 = vadd.f32 %v977, %v987
      %v993 = vadd.f32 %v978, %v988
      %v994 = vadd.f32 %v979, %v989
      %v995 = vmul.f32 %v675, 1.25
      %v996 = vmul.f32 %v676, 1.25
      %v997 = vmul.f32 %v677, 1.25
      %v998 = vmul.f32 %v678, 1.25
      %v999 = vmul.f32 %v679, 1.25
      %v1000 = vmul.f32 %v995, %v705
      %v1001 = vmul.f32 %v996, %v706
      %v1002 = vmul.f32 %v997, %v707
      %v1003 = vmul.f32 %v998, %v708
      %v1004 = vmul.f32 %v999, %v709
      %v1005 = vmul.f32 %v725, 1.25
      %v1006 = vmul.f32 %v726, 1.25
      %v1007 = vmul.f32 %v727, 1.25
      %v1008 = vmul.f32 %v728, 1.25
      %v1009 = vmul.f32 %v729, 1.25
      %v1010 = vmul.f32 %v1005, %v740
      %v1011 = vmul.f32 %v1006, %v741
      %v1012 = vmul.f32 %v1007, %v742
      %v1013 = vmul.f32 %v1008, %v743
      %v1014 = vmul.f32 %v1009, %v744
      %v1015 = vadd.f32 %v1000, %v1010
      %v1016 = vadd.f32 %v1001, %v1011
      %v1017 = vadd.f32 %v1002, %v1012
      %v1018 = vadd.f32 %v1003, %v1013
      %v1019 = vadd.f32 %v1004, %v1014
      %v1020 = vmul.f32 %v710, 1.25
      %v1021 = vmul.f32 %v711, 1.25
      %v1022 = vmul.f32 %v712, 1.25
      %v1023 = vmul.f32 %v713, 1.25
      %v1024 = vmul.f32 %v714, 1.25
      %v1025 = vmul.f32 %v1020, %v740
      %v1026 = vmul.f32 %v1021, %v741
      %v1027 = vmul.f32 %v1022, %v742
      %v1028 = vmul.f32 %v1023, %v743
      %v1029 = vmul.f32 %v1024, %v744
      %v1030 = vmul.f32 %v760, 1.25
      %v1031 = vmul.f32 %v761, 1.25
      %v1032 = vmul.f32 %v762, 1.25
      %v1033 = vmul.f32 %v763, 1.25
      %v1034 = vmul.f32 %v764, 1.25
      %v1035 = vmul.f32 %v1030, %v775
      %v1036 = vmul.f32 %v1031, %v776
      %v1037 = vmul.f32 %v1032, %v777
      %v1038 = vmul.f32 %v1033, %v778
      %v1039 = vmul.f32 %v1034, %v779
      %v1040 = vadd.f32 %v1025, %v1035
      %v1041 = vadd.f32 %v1026, %v1036
      %v1042 = vadd.f32 %v1027, %v1037
      %v1043 = vadd.f32 %v1028, %v1038
      %v1044 = vadd.f32 %v1029, %v1039
      %v1045 = vmul.f32 %v745, 1.25
      %v1046 = vmul.f32 %v746, 1.25
      %v1047 = vmul.f32 %v747, 1.25
      %v1048 = vmul.f32 %v748, 1.25
      %v1049 = vmul.f32 %v749, 1.25
      %v1050 = vmul.f32 %v1045, %v775
      %v1051 = vmul.f32 %v1046, %v776
      %v1052 = vmul.f32 %v1047, %v777
      %v1053 = vmul.f32 %v1048, %v778
      %v1054 = vmul.f32 %v1049, %v779
      %v1055 = vmul.f32 %v795, 1.25
      %v1056 = vmul.f32 %v796, 1.25
      %v1057 = vmul.f32 %v797, 1.25
      %v1058 = vmul.f32 %v798, 1.25
      %v1059 = vmul.f32 %v799, 1.25
      %v1060 = vmul.f32 %v1055, %v810
      %v1061 = vmul.f32 %v1056, %v811
      %v1062 = vmul.f32 %v1057, %v812
      %v1063 = vmul.f32 %v1058, %v813
      %v1064 = vmul.f32 %v1059, %v814
      %v1065 = vadd.f32 %v1050, %v1060
      %v1066 = vadd.f32 %v1051, %v1061
      %v1067 = vadd.f32 %v1052, %v1062
      %v1068 = vadd.f32 %v1053, %v1063
      %v1069 = vadd.f32 %v1054, %v1064
      %v1070 = vmul.f32 %v780, 1.25
      %v1071 = vmul.f32 %v781, 1.25
      %v1072 = vmul.f32 %v782, 1.25
      %v1073 = vmul.f32 %v783, 1.25
      %v1074 = vmul.f32 %v784, 1.25
      %v1075 = vmul.f32 %v1070, %v810
      %v1076 = vmul.f32 %v1071, %v811
      %v1077 = vmul.f32 %v1072, %v812
      %v1078 = vmul.f32 %v1073, %v813
      %v1079 = vmul.f32 %v1074, %v814
      %v1080 = vmul.f32 %v830, 1.25
      %v1081 = vmul.f32 %v831, 1.25
      %v1082 = vmul.f32 %v832, 1.25
      %v1083 = vmul.f32 %v833, 1.25
      %v1084 = vmul.f32 %v834, 1.25
      %v1085 = vmul.f32 %v1080, %v845
      %v1086 = vmul.f32 %v1081, %v846
      %v1087 = vmul.f32 %v1082, %v847
      %v1088 = vmul.f32 %v1083, %v848
      %v1089 = vmul.f32 %v1084, %v849
      %v1090 = vadd.f32 %v1075, %v1085
      %v1091 = vadd.f32 %v1076, %v1086
      %v1092 = vadd.f32 %v1077, %v1087
      %v1093 = vadd.f32 %v1078, %v1088
      %v1094 = vadd.f32 %v1079, %v1089
      %v1095 = vmul.f32 %v815, 1.25
      %v1096 = vmul.f32 %v816, 1.25
      %v1097 = vmul.f32 %v817, 1.25
      %v1098 = vmul.f32 %v818, 1.25
      %v1099 = vmul.f32 %v819, 1.25
      %v1100 = vmul.f32 %v1095, %v845
      %v1101 = vmul.f32 %v1096, %v846
      %v1102 = vmul.f32 %v1097, %v847
      %v1103 = vmul.f32 %v1098, %v848
      %v1104 = vmul.f32 %v1099, %v849
      %v1105 = vmul.f32 %v865, 1.25
      %v1106 = vmul.f32 %v866, 1.25
      %v1107 = vmul.f32 %v867, 1.25
      %v1108 = vmul.f32 %v868, 1.25
      %v1109 = vmul.f32 %v869, 1.25
      %v1110 = vmul.f32 %v1105, %v880
      %v1111 = vmul.f32 %v1106, %v881
      %v1112 = vmul.f32 %v1107, %v882
      %v1113 = vmul.f32 %v1108, %v883
      %v1114 = vmul.f32 %v1109, %v884
      %v1115 = vadd.f32 %v1100, %v1110
      %v1116 = vadd.f32 %v1101, %v1111
      %v1117 = vadd.f32 %v1102, %v1112
      %v1118 = vadd.f32 %v1103, %v1113
      %v1119 = vadd.f32 %v1104, %v1114
      %v1120 = vmul.f32 %v850, 1.25
      %v1121 = vmul.f32 %v851, 1.25
      %v1122 = vmul.f32 %v852, 1.25
      %v1123 = vmul.f32 %v853, 1.25
      %v1124 = vmul.f32 %v854, 1.25
      %v1125 = vmul.f32 %v1120, %v880
      %v1126 = vmul.f32 %v1121, %v881
      %v1127 = vmul.f32 %v1122, %v882
      %v1128 = vmul.f32 %v1123, %v883
      %v1129 = vmul.f32 %v1124, %v884
      %v1130 = vmul.f32 %v900, 1.25
      %v1131 = vmul.f32 %v901, 1.25
      %v1132 = vmul.f32 %v902, 1.25
      %v1133 = vmul.f32 %v903, 1.25
      %v1134 = vmul.f32 %v904, 1.25
      %v1135 = vmul.f32 %v1130, %v915
      %v1136 = vmul.f32 %v1131, %v916
      %v1137 = vmul.f32 %v1132, %v917
      %v1138 = vmul.f32 %v1133, %v918
      %v1139 = vmul.f32 %v1134, %v919
      %v1140 = vadd.f32 %v1125, %v1135
      %v1141 = vadd.f32 %v1126, %v1136
      %v1142 = vadd.f32 %v1127, %v1137
      %v1143 = vadd.f32 %v1128, %v1138
      %v1144 = vadd.f32 %v1129, %v1139
      %v1145 = vmul.f32 %v570, 0.8333333
      %v1146 = vmul.f32 %v571, 0.8333333
      %v1147 = vmul.f32 %v572, 0.8333333
      %v1148 = vmul.f32 %v573, 0.8333333
      %v1149 = vmul.f32 %v574, 0.8333333
      %v1150 = vmul.f32 %v1145, %v940
      %v1151 = vmul.f32 %v1146, %v941
      %v1152 = vmul.f32 %v1147, %v942
      %v1153 = vmul.f32 %v1148, %v943
      %v1154 = vmul.f32 %v1149, %v944
      %v1155 = vmul.f32 %v655, 0.8333333
      %v1156 = vmul.f32 %v656, 0.8333333
      %v1157 = vmul.f32 %v657, 0.8333333
      %v1158 = vmul.f32 %v658, 0.8333333
      %v1159 = vmul.f32 %v659, 0.8333333
      %v1160 = vmul.f32 %v1155, %v965
      %v1161 = vmul.f32 %v1156, %v966
      %v1162 = vmul.f32 %v1157, %v967
      %v1163 = vmul.f32 %v1158, %v968
      %v1164 = vmul.f32 %v1159, %v969
      %v1165 = vadd.f32 %v1150, %v1160
      %v1166 = vadd.f32 %v1151, %v1161
      %v1167 = vadd.f32 %v1152, %v1162
      %v1168 = vadd.f32 %v1153, %v1163
      %v1169 = vadd.f32 %v1154, %v1164
      %v1170 = vmul.f32 %v605, 0.8333333
      %v1171 = vmul.f32 %v606, 0.8333333
      %v1172 = vmul.f32 %v607, 0.8333333
      %v1173 = vmul.f32 %v608, 0.8333333
      %v1174 = vmul.f32 %v609, 0.8333333
      %v1175 = vmul.f32 %v1170, %v965
      %v1176 = vmul.f32 %v1171, %v966
      %v1177 = vmul.f32 %v1172, %v967
      %v1178 = vmul.f32 %v1173, %v968
      %v1179 = vmul.f32 %v1174, %v969
      %v1180 = vmul.f32 %v690, 0.8333333
      %v1181 = vmul.f32 %v691, 0.8333333
      %v1182 = vmul.f32 %v692, 0.8333333
      %v1183 = vmul.f32 %v693, 0.8333333
      %v1184 = vmul.f32 %v694, 0.8333333
      %v1185 = vmul.f32 %v1180, %v990
      %v1186 = vmul.f32 %v1181, %v991
      %v1187 = vmul.f32 %v1182, %v992
      %v1188 = vmul.f32 %v1183, %v993
      %v1189 = vmul.f32 %v1184, %v994
      %v1190 = vadd.f32 %v1175, %v1185
      %v1191 = vadd.f32 %v1176, %v1186
      %v1192 = vadd.f32 %v1177, %v1187
      %v1193 = vadd.f32 %v1178, %v1188
      %v1194 = vadd.f32 %v1179, %v1189
      %v1195 = vmul.f32 %v640, 0.8333333
      %v1196 = vmul.f32 %v641, 0.8333333
      %v1197 = vmul.f32 %v642, 0.8333333
      %v1198 = vmul.f32 %v643, 0.8333333
      %v1199 = vmul.f32 %v644, 0.8333333
      %v1200 = vmul.f32 %v1195, %v990
      %v1201 = vmul.f32 %v1196, %v991
      %v1202 = vmul.f32 %v1197, %v992
      %v1203 = vmul.f32 %v1198, %v993
      %v1204 = vmul.f32 %v1199, %v994
      %v1205 = vmul.f32 %v725, 0.8333333
      %v1206 = vmul.f32 %v726, 0.8333333
      %v1207 = vmul.f32 %v727, 0.8333333
      %v1208 = vmul.f32 %v728, 0.8333333
      %v1209 = vmul.f32 %v729, 0.8333333
      %v1210 = vmul.f32 %v1205, %v1015
      %v1211 = vmul.f32 %v1206, %v1016
      %v1212 = vmul.f32 %v1207, %v1017
      %v1213 = vmul.f32 %v1208, %v1018
      %v1214 = vmul.f32 %v1209, %v1019
      %v1215 = vadd.f32 %v1200, %v1210
      %v1216 = vadd.f32 %v1201, %v1211
      %v1217 = vadd.f32 %v1202, %v1212
      %v1218 = vadd.f32 %v1203, %v1213
      %v1219 = vadd.f32 %v1204, %v1214
      %v1220 = vmul.f32 %v675, 0.8333333
      %v1221 = vmul.f32 %v676, 0.8333333
      %v1222 = vmul.f32 %v677, 0.8333333
      %v1223 = vmul.f32 %v678, 0.8333333
      %v1224 = vmul.f32 %v679, 0.8333333
      %v1225 = vmul.f32 %v1220, %v1015
      %v1226 = vmul.f32 %v1221, %v1016
      %v1227 = vmul.f32 %v1222, %v1017
      %v1228 = vmul.f32 %v1223, %v1018
      %v1229 = vmul.f32 %v1224, %v1019
      %v1230 = vmul.f32 %v760, 0.8333333
      %v1231 = vmul.f32 %v761, 0.8333333
      %v1232 = vmul.f32 %v762, 0.8333333
      %v1233 = vmul.f32 %v763, 0.8333333
      %v1234 = vmul.f32 %v764, 0.8333333
      %v1235 = vmul.f32 %v1230, %v1040
      %v1236 = vmul.f32 %v1231, %v1041
      %v1237 = vmul.f32 %v1232, %v1042
      %v1238 = vmul.f32 %v1233, %v1043
      %v1239 = vmul.f32 %v1234, %v1044
      %v1240 = vadd.f32 %v1225, %v1235
      %v1241 = vadd.f32 %v1226, %v1236
      %v1242 = vadd.f32 %v1227, %v1237
      %v1243 = vadd.f32 %v1228, %v1238
      %v1244 = vadd.f32 %v1229, %v1239
      %v1245 = vmul.f32 %v710, 0.8333333
      %v1246 = vmul.f32 %v711, 0.8333333
      %v1247 = vmul.f32 %v712, 0.8333333
      %v1248 = vmul.f32 %v713, 0.8333333
      %v1249 = vmul.f32 %v714, 0.8333333
      %v1250 = vmul.f32 %v1245, %v1040
      %v1251 = vmul.f32 %v1246, %v1041
      %v1252 = vmul.f32 %v1247, %v1042
      %v1253 = vmul.f32 %v1248, %v1043
      %v1254 = vmul.f32 %v1249, %v1044
      %v1255 = vmul.f32 %v795, 0.8333333
      %v1256 = vmul.f32 %v796, 0.8333333
      %v1257 = vmul.f32 %v797, 0.8333333
      %v1258 = vmul.f32 %v798, 0.8333333
      %v1259 = vmul.f32 %v799, 0.8333333
      %v1260 = vmul.f32 %v1255, %v1065
      %v1261 = vmul.f32 %v1256, %v1066
      %v1262 = vmul.f32 %v1257, %v1067
      %v1263 = vmul.f32 %v1258, %v1068
      %v1264 = vmul.f32 %v1259, %v1069
      %v1265 = vadd.f32 %v1250, %v1260
      %v1266 = vadd.f32 %v1251, %v1261
      %v1267 = vadd.f32 %v1252, %v1262
      %v1268 = vadd.f32 %v1253, %v1263
      %v1269 = vadd.f32 %v1254, %v1264
      %v1270 = vmul.f32 %v745, 0.8333333
      %v1271 = vmul.f32 %v746, 0.8333333
      %v1272 = vmul.f32 %v747, 0.8333333
      %v1273 = vmul.f32 %v748, 0.8333333
      %v1274 = vmul.f32 %v749, 0.8333333
      %v1275 = vmul.f32 %v1270, %v1065
      %v1276 = vmul.f32 %v1271, %v1066
      %v1277 = vmul.f32 %v1272, %v1067
      %v1278 = vmul.f32 %v1273, %v1068
      %v1279 = vmul.f32 %v1274, %v1069
      %v1280 = vmul.f32 %v830, 0.8333333
      %v1281 = vmul.f32 %v831, 0.8333333
      %v1282 = vmul.f32 %v832, 0.8333333
      %v1283 = vmul.f32 %v833, 0.8333333
      %v1284 = vmul.f32 %v834, 0.8333333
      %v1285 = vmul.f32 %v1280, %v1090
      %v1286 = vmul.f32 %v1281, %v1091
      %v1287 = vmul.f32 %v1282, %v1092
      %v1288 = vmul.f32 %v1283, %v1093
      %v1289 = vmul.f32 %v1284, %v1094
      %v1290 = vadd.f32 %v1275, %v1285
      %v1291 = vadd.f32 %v1276, %v1286
      %v1292 = vadd.f32 %v1277, %v1287
      %v1293 = vadd.f32 %v1278, %v1288
      %v1294 = vadd.f32 %v1279, %v1289
      %v1295 = vmul.f32 %v780, 0.8333333
      %v1296 = vmul.f32 %v781, 0.8333333
      %v1297 = vmul.f32 %v782, 0.8333333
      %v1298 = vmul.f32 %v783, 0.8333333
      %v1299 = vmul.f32 %v784, 0.8333333
      %v1300 = vmul.f32 %v1295, %v1090
      %v1301 = vmul.f32 %v1296, %v1091
      %v1302 = vmul.f32 %v1297, %v1092
      %v1303 = vmul.f32 %v1298, %v1093
      %v1304 = vmul.f32 %v1299, %v1094
      %v1305 = vmul.f32 %v865, 0.8333333
      %v1306 = vmul.f32 %v866, 0.8333333
      %v1307 = vmul.f32 %v867, 0.8333333
      %v1308 = vmul.f32 %v868, 0.8333333
      %v1309 = vmul.f32 %v869, 0.8333333
      %v1310 = vmul.f32 %v1305, %v1115
      %v1311 = vmul.f32 %v1306, %v1116
      %v1312 = vmul.f32 %v1307, %v1117
      %v1313 = vmul.f32 %v1308, %v1118
      %v1314 = vmul.f32 %v1309, %v1119
      %v1315 = vadd.f32 %v1300, %v1310
      %v1316 = vadd.f32 %v1301, %v1311
      %v1317 = vadd.f32 %v1302, %v1312
      %v1318 = vadd.f32 %v1303, %v1313
      %v1319 = vadd.f32 %v1304, %v1314
      %v1320 = vmul.f32 %v815, 0.8333333
      %v1321 = vmul.f32 %v816, 0.8333333
      %v1322 = vmul.f32 %v817, 0.8333333
      %v1323 = vmul.f32 %v818, 0.8333333
      %v1324 = vmul.f32 %v819, 0.8333333
      %v1325 = vmul.f32 %v1320, %v1115
      %v1326 = vmul.f32 %v1321, %v1116
      %v1327 = vmul.f32 %v1322, %v1117
      %v1328 = vmul.f32 %v1323, %v1118
      %v1329 = vmul.f32 %v1324, %v1119
      %v1330 = vmul.f32 %v900, 0.8333333
      %v1331 = vmul.f32 %v901, 0.8333333
      %v1332 = vmul.f32 %v902, 0.8333333
      %v1333 = vmul.f32 %v903, 0.8333333
      %v1334 = vmul.f32 %v904, 0.8333333
      %v1335 = vmul.f32 %v1330, %v1140
      %v1336 = vmul.f32 %v1331, %v1141
      %v1337 = vmul.f32 %v1332, %v1142
      %v1338 = vmul.f32 %v1333, %v1143
      %v1339 = vmul.f32 %v1334, %v1144
      %v1340 = vadd.f32 %v1325, %v1335
      %v1341 = vadd.f32 %v1326, %v1336
      %v1342 = vadd.f32 %v1327, %v1337
      %v1343 = vadd.f32 %v1328, %v1338
      %v1344 = vadd.f32 %v1329, %v1339
      %1345 = vst [vmem:[%s289 + $0xa0] sm:$0xff] %v1165
      %1346 = vst [vmem:[%s289 + $0xc0] sm:$0xff] %v1166
      %1347 = vst [vmem:[%s289 + $0xe0] sm:$0xff] %v1167
      %1348 = vst [vmem:[%s289 + $0x100] sm:$0xff] %v1168
      %1349 = vst [vmem:[%s289 + $0x120] sm:$0xf] %v1169
      %1350 = vst [vmem:[%s289 + $0x140] sm:$0xff] %v1190
      %1351 = vst [vmem:[%s289 + $0x160] sm:$0xff] %v1191
      %1352 = vst [vmem:[%s289 + $0x180] sm:$0xff] %v1192
      %1353 = vst [vmem:[%s289 + $0x1a0] sm:$0xff] %v1193
      %1354 = vst [vmem:[%s289 + $0x1c0] sm:$0xf] %v1194
      %1355 = vst [vmem:[%s289 + $0x1e0] sm:$0xff] %v1215
      %1356 = vst [vmem:[%s289 + $0x200] sm:$0xff] %v1216
      %1357 = vst [vmem:[%s289 + $0x220] sm:$0xff] %v1217
      %1358 = vst [vmem:[%s289 + $0x240] sm:$0xff] %v1218
      %1359 = vst [vmem:[%s289 + $0x260] sm:$0xf] %v1219
      %1360 = vst [vmem:[%s289 + $0x280] sm:$0xff] %v1240
      %1361 = vst [vmem:[%s289 + $0x2a0] sm:$0xff] %v1241
      %1362 = vst [vmem:[%s289 + $0x2c0] sm:$0xff] %v1242
      %1363 = vst [vmem:[%s289 + $0x2e0] sm:$0xff] %v1243
      %1364 = vst [vmem:[%s289 + $0x300] sm:$0xf] %v1244
      %1365 = vst [vmem:[%s289 + $0x320] sm:$0xff] %v1265
      %1366 = vst [vmem:[%s289 + $0x340] sm:$0xff] %v1266
      %1367 = vst [vmem:[%s289 + $0x360] sm:$0xff] %v1267
      %1368 = vst [vmem:[%s289 + $0x380] sm:$0xff] %v1268
      %1369 = vst [vmem:[%s289 + $0x3a0] sm:$0xf] %v1269
      %1370 = vst [vmem:[%s289 + $0x3c0] sm:$0xff] %v1290
      %1371 = vst [vmem:[%s289 + $0x3e0] sm:$0xff] %v1291
      %1372 = vst [vmem:[%s289 + $0x400] sm:$0xff] %v1292
      %1373 = vst [vmem:[%s289 + $0x420] sm:$0xff] %v1293
      %1374 = vst [vmem:[%s289 + $0x440] sm:$0xf] %v1294
      %1375 = vst [vmem:[%s289 + $0x460] sm:$0xff] %v1315
      %1376 = vst [vmem:[%s289 + $0x480] sm:$0xff] %v1316
      %1377 = vst [vmem:[%s289 + $0x4a0] sm:$0xff] %v1317
      %1378 = vst [vmem:[%s289 + $0x4c0] sm:$0xff] %v1318
      %1379 = vst [vmem:[%s289 + $0x4e0] sm:$0xf] %v1319
      %1380 = vst [vmem:[%s289 + $0x500] sm:$0xff] %v1340
      %1381 = vst [vmem:[%s289 + $0x520] sm:$0xff] %v1341
      %1382 = vst [vmem:[%s289 + $0x540] sm:$0xff] %v1342
      %1383 = vst [vmem:[%s289 + $0x560] sm:$0xff] %v1343
      %1384 = vst [vmem:[%s289 + $0x580] sm:$0xf] %v1344
    $region30: #{tpu_custom_call.1} parent=1 // loop_footer
      %s242 = sadd.s32 1, %s238
    $region31: #{tpu_custom_call.1} parent=1 // loop_footer_branch
      %237 = sbr.rel target = $region27
    $region32: #{tpu_custom_call.1} parent=1 // loop_exit
      _
    %v1385 = vld [vmem:[#allocation6] sm:$0xff]
    %v1386 = vld [vmem:[#allocation6 + $0x8] sm:$0xff]
    %v1387 = vld [vmem:[#allocation6 + $0x10] sm:$0xff]
    %v1388 = vld [vmem:[#allocation2] sm:$0xff]
    %v1389 = vld [vmem:[#allocation2 + $0x8] sm:$0xff]
    %v1390 = vld [vmem:[#allocation2 + $0x10] sm:$0xff]
    %v1391 = vld [vmem:[#allocation2 + $0x18] sm:$0xff]
    %v1392 = vld [vmem:[#allocation2 + $0x20] sm:$0xff]
    %v1393 = vld [vmem:[#allocation2 + $0x28] sm:$0xff]
    %v1394 = vld [vmem:[#allocation2 + $0x30] sm:$0xff]
    %v1395 = vld [vmem:[#allocation2 + $0x38] sm:$0xff]
    %v1396 = vld [vmem:[#allocation2 + $0x40] sm:$0xff]
    %v1397 = vld [vmem:[#allocation2 + $0x48] sm:$0xff]
    %v1398 = vld [vmem:[#allocation2 + $0x50] sm:$0xff]
    %v1399 = vld [vmem:[#allocation2 + $0x58] sm:$0xff]
    %v1400 = vld [vmem:[#allocation2 + $0x60] sm:$0xff]
    %v1401 = vld [vmem:[#allocation2 + $0x68] sm:$0xff]
    %v1402 = vld [vmem:[#allocation2 + $0x70] sm:$0xff]
    %v1403 = vld [vmem:[#allocation2 + $0x78] sm:$0xff]
    %v1404 = vld [vmem:[#allocation2 + $0x80] sm:$0xff]
    %v1405 = vld [vmem:[#allocation2 + $0x88] sm:$0xff]
    %v1406 = vld [vmem:[#allocation2 + $0x90] sm:$0xff]
    %v1407 = vld [vmem:[#allocation2 + $0x98] sm:$0xff]
    %v1408 = vld [vmem:[#allocation2 + $0xa0] sm:$0xff]
    %v1409 = vld [vmem:[#allocation2 + $0xa8] sm:$0xff]
    %v1410 = vld [vmem:[#allocation2 + $0xb0] sm:$0xff]
    %v1411 = vld [vmem:[#allocation2 + $0xb8] sm:$0xff]
    %v1412 = vld [vmem:[#allocation2 + $0xc0] sm:$0xff]
    %v1413 = vld [vmem:[#allocation2 + $0xc8] sm:$0xff]
    %v1414 = vld [vmem:[#allocation2 + $0xd0] sm:$0xff]
    %v1415 = vld [vmem:[#allocation2 + $0xd8] sm:$0xff]
    %v1416 = vld [vmem:[#allocation2 + $0xe0] sm:$0xff]
    %v1417 = vld [vmem:[#allocation2 + $0xe8] sm:$0xff]
    %v1418 = vld [vmem:[#allocation2 + $0xf0] sm:$0xff]
    %v1419 = vld [vmem:[#allocation2 + $0xf8] sm:$0xff]
    %v1420 = vld [vmem:[#allocation2 + $0x100] sm:$0xff]
    %v1421 = vld [vmem:[#allocation2 + $0x108] sm:$0xff]
    %v1422 = vld [vmem:[#allocation2 + $0x110] sm:$0xff]
    %v1423 = vld [vmem:[#allocation2 + $0x118] sm:$0xff]
    %v1424 = vld [vmem:[#allocation2 + $0x120] sm:$0xff]
    %v1425 = vld [vmem:[#allocation2 + $0x128] sm:$0xff]
    %v1426 = vld [vmem:[#allocation2 + $0x130] sm:$0xff]
    %v1427 = vld [vmem:[#allocation2 + $0x138] sm:$0xff]
    %v1428 = vld [vmem:[#allocation2 + $0x140] sm:$0xff]
    %v1429 = vld [vmem:[#allocation2 + $0x148] sm:$0xff]
    %v1430 = vld [vmem:[#allocation2 + $0x150] sm:$0xff]
    %v1431 = vld [vmem:[#allocation2 + $0x158] sm:$0xff]
    %v1432 = vld [vmem:[#allocation2 + $0x160] sm:$0xff]
    %v1433 = vld [vmem:[#allocation2 + $0x168] sm:$0xff]
    %v1434 = vld [vmem:[#allocation2 + $0x170] sm:$0xff]
    %v1435 = vld [vmem:[#allocation2 + $0x178] sm:$0xff]
    %v1436 = vld [vmem:[#allocation2 + $0x180] sm:$0xff]
    %v1437 = vld [vmem:[#allocation2 + $0x188] sm:$0xff]
    %v1438 = vld [vmem:[#allocation2 + $0x190] sm:$0xff]
    %v1439 = vld [vmem:[#allocation2 + $0x198] sm:$0xff]
    %v1440 = vld [vmem:[#allocation2 + $0x1a0] sm:$0xff]
    %v1441 = vld [vmem:[#allocation2 + $0x1a8] sm:$0xff]
    %v1442 = vld [vmem:[#allocation2 + $0x1b0] sm:$0xff]
    %v1443 = vld [vmem:[#allocation2 + $0x1b8] sm:$0xff]
    %v1444 = vld [vmem:[#allocation2 + $0x1c0] sm:$0xff]
    %v1445 = vld [vmem:[#allocation2 + $0x1c8] sm:$0xff]
    %v1446 = vld [vmem:[#allocation2 + $0x1d0] sm:$0xff]
    %v1447 = vld [vmem:[#allocation2 + $0x1d8] sm:$0xff]
    %v1448 = vld [vmem:[#allocation2 + $0x1e0] sm:$0xff]
    %v1449 = vld [vmem:[#allocation2 + $0x1e8] sm:$0xff]
    %v1450 = vld [vmem:[#allocation2 + $0x1f0] sm:$0xff]
    %v1451 = vld [vmem:[#allocation2 + $0x1f8] sm:$0xff]
    %v1452 = vld [vmem:[#allocation2 + $0x200] sm:$0xff]
    %v1453 = vld [vmem:[#allocation2 + $0x208] sm:$0xff]
    %v1454 = vld [vmem:[#allocation2 + $0x210] sm:$0xff]
    %v1455 = vld [vmem:[#allocation2 + $0x218] sm:$0xff]
    %v1456 = vld [vmem:[#allocation2 + $0x220] sm:$0xff]
    %v1457 = vld [vmem:[#allocation2 + $0x228] sm:$0xff]
    %v1458 = vld [vmem:[#allocation2 + $0x230] sm:$0xff]
    %v1459 = vld [vmem:[#allocation2 + $0x238] sm:$0xff]
    %v1460 = vld [vmem:[#allocation2 + $0x240] sm:$0xff]
    %v1461 = vld [vmem:[#allocation2 + $0x248] sm:$0xff]
    %v1462 = vld [vmem:[#allocation2 + $0x250] sm:$0xff]
    %v1463 = vld [vmem:[#allocation2 + $0x258] sm:$0xff]
    %v1464 = vld [vmem:[#allocation2 + $0x260] sm:$0xff]
    %v1465 = vld [vmem:[#allocation2 + $0x268] sm:$0xff]
    %v1466 = vld [vmem:[#allocation2 + $0x270] sm:$0xff]
    %v1467 = vld [vmem:[#allocation2 + $0x278] sm:$0xff]
    %v1468 = vld [vmem:[#allocation2 + $0x280] sm:$0xff]
    %v1469 = vld [vmem:[#allocation2 + $0x288] sm:$0xff]
    %v1470 = vld [vmem:[#allocation2 + $0x290] sm:$0xff]
    %v1471 = vld [vmem:[#allocation2 + $0x298] sm:$0xff]
    %v1472 = vld [vmem:[#allocation2 + $0x2a0] sm:$0xff]
    %v1473 = vld [vmem:[#allocation2 + $0x2a8] sm:$0xff]
    %v1474 = vld [vmem:[#allocation2 + $0x2b0] sm:$0xff]
    %v1475 = vld [vmem:[#allocation2 + $0x2b8] sm:$0xff]
    %v1476 = vld [vmem:[#allocation2 + $0x2c0] sm:$0xff]
    %v1477 = vld [vmem:[#allocation2 + $0x2c8] sm:$0xff]
    %v1478 = vld [vmem:[#allocation2 + $0x2d0] sm:$0xff]
    %v1479 = vld [vmem:[#allocation2 + $0x2d8] sm:$0xff]
    %v1480 = vld [vmem:[#allocation2 + $0x2e0] sm:$0xff]
    %v1481 = vld [vmem:[#allocation2 + $0x2e8] sm:$0xff]
    %v1482 = vld [vmem:[#allocation2 + $0x2f0] sm:$0xff]
    %v1483 = vld [vmem:[#allocation2 + $0x2f8] sm:$0xff]
    %v1484 = vld [vmem:[#allocation2 + $0x300] sm:$0xff]
    %v1485 = vld [vmem:[#allocation2 + $0x308] sm:$0xff]
    %v1486 = vld [vmem:[#allocation2 + $0x310] sm:$0xff]
    %v1487 = vld [vmem:[#allocation2 + $0x318] sm:$0xff]
    %v1488 = vld [vmem:[#allocation2 + $0x320] sm:$0xff]
    %v1489 = vld [vmem:[#allocation2 + $0x328] sm:$0xff]
    %v1490 = vld [vmem:[#allocation2 + $0x330] sm:$0xff]
    %v1491 = vld [vmem:[#allocation2 + $0x338] sm:$0xff]
    %v1492 = vld [vmem:[#allocation2 + $0x340] sm:$0xff]
    %v1493 = vld [vmem:[#allocation2 + $0x348] sm:$0xff]
    %v1494 = vld [vmem:[#allocation2 + $0x350] sm:$0xff]
    %v1495 = vld [vmem:[#allocation2 + $0x358] sm:$0xff]
    %v1496 = vld [vmem:[#allocation2 + $0x360] sm:$0xff]
    %v1497 = vld [vmem:[#allocation2 + $0x368] sm:$0xff]
    %v1498 = vld [vmem:[#allocation2 + $0x370] sm:$0xff]
    %v1499 = vld [vmem:[#allocation2 + $0x378] sm:$0xff]
    %v1500 = vld [vmem:[#allocation2 + $0x380] sm:$0xff]
    %v1501 = vld [vmem:[#allocation2 + $0x388] sm:$0xff]
    %v1502 = vld [vmem:[#allocation2 + $0x390] sm:$0xff]
    %v1503 = vld [vmem:[#allocation2 + $0x398] sm:$0xff]
    %v1504 = vld [vmem:[#allocation2 + $0x3a0] sm:$0xff]
    %v1505 = vld [vmem:[#allocation2 + $0x3a8] sm:$0xff]
    %v1506 = vld [vmem:[#allocation2 + $0x3b0] sm:$0xff]
    %v1507 = vld [vmem:[#allocation2 + $0x3b8] sm:$0xff]
    %v1508 = vld [vmem:[#allocation2 + $0x3c0] sm:$0xff]
    %v1509 = vld [vmem:[#allocation2 + $0x3c8] sm:$0xff]
    %v1510 = vld [vmem:[#allocation2 + $0x3d0] sm:$0xff]
    %v1511 = vld [vmem:[#allocation2 + $0x3d8] sm:$0xff]
    %v1512 = vld [vmem:[#allocation2 + $0x3e0] sm:$0xff]
    %v1513 = vld [vmem:[#allocation2 + $0x3e8] sm:$0xff]
    %v1514 = vld [vmem:[#allocation2 + $0x3f0] sm:$0xff]
    %v1515 = vld [vmem:[#allocation2 + $0x3f8] sm:$0xff]
    %v1516 = vld [vmem:[#allocation2 + $0x400] sm:$0xff]
    %v1517 = vld [vmem:[#allocation2 + $0x408] sm:$0xff]
    %v1518 = vld [vmem:[#allocation2 + $0x410] sm:$0xff]
    %v1519 = vld [vmem:[#allocation2 + $0x418] sm:$0xff]
    %v1520 = vld [vmem:[#allocation2 + $0x420] sm:$0xff]
    %v1521 = vld [vmem:[#allocation2 + $0x428] sm:$0xff]
    %v1522 = vld [vmem:[#allocation2 + $0x430] sm:$0xff]
    %v1523 = vld [vmem:[#allocation2 + $0x438] sm:$0xff]
    %v1524 = vld [vmem:[#allocation2 + $0x440] sm:$0xff]
    %v1525 = vld [vmem:[#allocation2 + $0x448] sm:$0xff]
    %v1526 = vld [vmem:[#allocation2 + $0x450] sm:$0xff]
    %v1527 = vld [vmem:[#allocation2 + $0x458] sm:$0xff]
    %v1528 = vld [vmem:[#allocation2 + $0x460] sm:$0xff]
    %v1529 = vld [vmem:[#allocation2 + $0x468] sm:$0xff]
    %v1530 = vld [vmem:[#allocation2 + $0x470] sm:$0xff]
    %v1531 = vld [vmem:[#allocation2 + $0x478] sm:$0xff]
    %v1532 = vld [vmem:[#allocation2 + $0x480] sm:$0xff]
    %v1533 = vld [vmem:[#allocation2 + $0x488] sm:$0xff]
    %v1534 = vld [vmem:[#allocation2 + $0x490] sm:$0xff]
    %v1535 = vld [vmem:[#allocation2 + $0x498] sm:$0xff]
    %v1536 = vld [vmem:[#allocation2 + $0x4a0] sm:$0xff]
    %v1537 = vld [vmem:[#allocation2 + $0x4a8] sm:$0xff]
    %v1538 = vld [vmem:[#allocation2 + $0x4b0] sm:$0xff]
    %v1539 = vld [vmem:[#allocation2 + $0x4b8] sm:$0xff]
    %v1540 = vld [vmem:[#allocation2 + $0x4c0] sm:$0xff]
    %v1541 = vld [vmem:[#allocation2 + $0x4c8] sm:$0xff]
    %v1542 = vld [vmem:[#allocation2 + $0x4d0] sm:$0xff]
    %v1543 = vld [vmem:[#allocation2 + $0x4d8] sm:$0xff]
    %v1544 = vld [vmem:[#allocation2 + $0x4e0] sm:$0xff]
    %v1545 = vld [vmem:[#allocation2 + $0x4e8] sm:$0xff]
    %v1546 = vld [vmem:[#allocation2 + $0x4f0] sm:$0xff]
    %v1547 = vld [vmem:[#allocation2 + $0x4f8] sm:$0xff]
    %v1548 = vld [vmem:[#allocation2 + $0x500] sm:$0xff]
    %v1549 = vld [vmem:[#allocation2 + $0x508] sm:$0xff]
    %v1550 = vld [vmem:[#allocation2 + $0x510] sm:$0xff]
    %v1551 = vld [vmem:[#allocation2 + $0x518] sm:$0xff]
    %v1552 = vld [vmem:[#allocation2 + $0x520] sm:$0xff]
    %v1553 = vld [vmem:[#allocation2 + $0x528] sm:$0xff]
    %v1554 = vld [vmem:[#allocation2 + $0x530] sm:$0xff]
    %v1555 = vld [vmem:[#allocation2 + $0x538] sm:$0xff]
    %v1556 = vld [vmem:[#allocation2 + $0x540] sm:$0xff]
    %v1557 = vld [vmem:[#allocation2 + $0x548] sm:$0xff]
    %v1558 = vld [vmem:[#allocation2 + $0x550] sm:$0xff]
    %v1559 = vld [vmem:[#allocation2 + $0x558] sm:$0xff]
    %v1560 = vld [vmem:[#allocation2 + $0x560] sm:$0xff]
    %v1561 = vld [vmem:[#allocation2 + $0x568] sm:$0xff]
    %v1562 = vld [vmem:[#allocation2 + $0x570] sm:$0xff]
    %v1563 = vld [vmem:[#allocation2 + $0x578] sm:$0xff]
    %v1564 = vld [vmem:[#allocation2 + $0x580] sm:$0xff]
    %v1565 = vld [vmem:[#allocation2 + $0x588] sm:$0xff]
    %v1566 = vld [vmem:[#allocation2 + $0x590] sm:$0xff]
    %v1567 = vld [vmem:[#allocation2 + $0x598] sm:$0xff]
    %v1568 = vld [vmem:[#allocation2 + $0x5a0] sm:$0xff]
    %v1569 = vld [vmem:[#allocation2 + $0x5a8] sm:$0xff]
    %v1570 = vld [vmem:[#allocation2 + $0x5b0] sm:$0xff]
    %v1571 = vld [vmem:[#allocation2 + $0x5b8] sm:$0xff]
    %v1572 = vld [vmem:[#allocation2 + $0x5c0] sm:$0xff]
    %v1573 = vld [vmem:[#allocation2 + $0x5c8] sm:$0xff]
    %v1574 = vld [vmem:[#allocation2 + $0x5d0] sm:$0xff]
    %v1575 = vld [vmem:[#allocation2 + $0x5d8] sm:$0xff]
    %v1576 = vld [vmem:[#allocation2 + $0x5e0] sm:$0xff]
    %v1577 = vld [vmem:[#allocation2 + $0x5e8] sm:$0xff]
    %v1578 = vld [vmem:[#allocation2 + $0x5f0] sm:$0xff]
    %v1579 = vld [vmem:[#allocation2 + $0x5f8] sm:$0xff]
    %v1580 = vld [vmem:[%s2] sm:$0xff]
    %1582 = vset.pattern.permute.xlu0 0
    %1583 = vperm.xlu0 %1582, %v1580
    %v1584 = vpop.permute.xlu0 %1583
    %1586 = vmatprep.subr.mxu0 %v1389
    %1587 = vmatpush1.msra.mxu0 %v1388
    %1588 = vmatprep.subr.mxu0 %v1393
    %1589 = vmatpush1.msra.mxu0 %v1392
    %1590 = vmatprep.subr.mxu0 %v1397
    %1591 = vmatpush1.msra.mxu0 %v1396
    %1592 = vmatprep.subr.mxu0 %v1401
    %1593 = vmatpush1.msra.mxu0 %v1400
    %1594 = vmatprep.subr.mxu0 %v1405
    %1595 = vmatpush1.msra.mxu0 %v1404
    %1596 = vmatprep.subr.mxu0 %v1409
    %1597 = vmatpush1.msra.mxu0 %v1408
    %1598 = vmatprep.subr.mxu0 %v1413
    %1599 = vmatpush1.msra.mxu0 %v1412
    %1600 = vmatprep.subr.mxu0 %v1417
    %1601 = vmatpush1.msra.mxu0 %v1416
    %1602 = vmatprep.subr.mxu0 %v1421
    %1603 = vmatpush1.msra.mxu0 %v1420
    %1604 = vmatprep.subr.mxu0 %v1425
    %1605 = vmatpush1.msra.mxu0 %v1424
    %1606 = vmatprep.subr.mxu0 %v1429
    %1607 = vmatpush1.msra.mxu0 %v1428
    %1608 = vmatprep.subr.mxu0 %v1433
    %1609 = vmatpush1.msra.mxu0 %v1432
    %1610 = vmatprep.subr.mxu0 %v1437
    %1611 = vmatpush1.msra.mxu0 %v1436
    %1612 = vmatprep.subr.mxu0 %v1441
    %1613 = vmatpush1.msra.mxu0 %v1440
    %1614 = vmatprep.subr.mxu0 %v1445
    %1615 = vmatpush1.msra.mxu0 %v1444
    %1616 = vmatprep.subr.mxu0 %v1449
    %1617 = vmatpush1.msra.mxu0 %v1448
    %1618 = vmatprep.subr.mxu0 %v1453
    %1619 = vmatpush1.msra.mxu0 %v1452
    %1620 = vmatprep.subr.mxu0 %v1457
    %1621 = vmatpush1.msra.mxu0 %v1456
    %1622 = vmatprep.subr.mxu0 %v1461
    %1623 = vmatpush1.msra.mxu0 %v1460
    %1624 = vmatprep.subr.mxu0 %v1465
    %1625 = vmatpush1.msra.mxu0 %v1464
    %1626 = vmatprep.subr.mxu0 %v1469
    %1627 = vmatpush1.msra.mxu0 %v1468
    %1628 = vmatprep.subr.mxu0 %v1473
    %1629 = vmatpush1.msra.mxu0 %v1472
    %1630 = vmatprep.subr.mxu0 %v1477
    %1631 = vmatpush1.msra.mxu0 %v1476
    %1632 = vmatprep.subr.mxu0 %v1481
    %1633 = vmatpush1.msra.mxu0 %v1480
    %1634 = vmatprep.subr.mxu0 %v1485
    %1635 = vmatpush1.msra.mxu0 %v1484
    %1636 = vmatprep.subr.mxu0 %v1489
    %1637 = vmatpush1.msra.mxu0 %v1488
    %1638 = vmatprep.subr.mxu0 %v1493
    %1639 = vmatpush1.msra.mxu0 %v1492
    %1640 = vmatprep.subr.mxu0 %v1497
    %1641 = vmatpush1.msra.mxu0 %v1496
    %1642 = vmatprep.subr.mxu0 %v1501
    %1643 = vmatpush1.msra.mxu0 %v1500
    %1644 = vmatprep.subr.mxu0 %v1505
    %1645 = vmatpush1.msra.mxu0 %v1504
    %1646 = vmatprep.subr.mxu0 %v1509
    %1647 = vmatpush1.msra.mxu0 %v1508
    %1648 = vmatprep.subr.mxu0 %v1513
    %1649 = vmatpush1.msra.mxu0 %v1512
    %1650 = vmatprep.mubr.f32.mxu0 %v1386
    %1651 = vmatmul.mubr.f32.gmra.mrb[0].mxu0 %v1385
    %v1652 = vpop.f32.mrb[0].mxu0
    %v1653 = vadd.f32 %v1584, %v1652
    %v1654 = vpop.f32.mrb[0].mxu0
    %v1655 = vadd.f32 %v1584, %v1654
    %1656 = vdwg.mxu0
    %1657 = vmatprep.subr.mxu0 %v1517
    %1658 = vmatpush1.msra.mxu0 %v1516
    %1659 = vmatprep.subr.mxu0 %v1521
    %1660 = vmatpush1.msra.mxu0 %v1520
    %1661 = vmatprep.subr.mxu0 %v1525
    %1662 = vmatpush1.msra.mxu0 %v1524
    %1663 = vmatprep.subr.mxu0 %v1529
    %1664 = vmatpush1.msra.mxu0 %v1528
    %1665 = vmatprep.subr.mxu0 %v1533
    %1666 = vmatpush1.msra.mxu0 %v1532
    %1667 = vmatprep.subr.mxu0 %v1537
    %1668 = vmatpush1.msra.mxu0 %v1536
    %1669 = vmatprep.subr.mxu0 %v1541
    %1670 = vmatpush1.msra.mxu0 %v1540
    %1671 = vmatprep.subr.mxu0 %v1545
    %1672 = vmatpush1.msra.mxu0 %v1544
    %1673 = vmatprep.subr.mxu0 %v1549
    %1674 = vmatpush1.msra.mxu0 %v1548
    %1675 = vmatprep.subr.mxu0 %v1553
    %1676 = vmatpush1.msra.mxu0 %v1552
    %1677 = vmatprep.subr.mxu0 %v1557
    %1678 = vmatpush1.msra.mxu0 %v1556
    %1679 = vmatprep.subr.mxu0 %v1561
    %1680 = vmatpush1.msra.mxu0 %v1560
    %1681 = vmatprep.subr.mxu0 %v1565
    %1682 = vmatpush1.msra.mxu0 %v1564
    %1683 = vmatprep.subr.mxu0 %v1569
    %1684 = vmatpush1.msra.mxu0 %v1568
    %1685 = vmatprep.subr.mxu0 %v1573
    %1686 = vmatpush1.msra.mxu0 %v1572
    %1687 = vmatprep.subr.mxu0 %v1577
    %1688 = vmatpush1.msra.mxu0 %v1576
    %1689 = vmatprep.subr.mxu0 0.0
    %1690 = vmatpush1.msra.mxu0 0.0
    %1691 = vmatprep.subr.mxu0 0.0
    %1692 = vmatpush1.msra.mxu0 0.0
    %1693 = vmatprep.subr.mxu0 0.0
    %1694 = vmatpush1.msra.mxu0 0.0
    %1695 = vmatprep.subr.mxu0 0.0
    %1696 = vmatpush1.msra.mxu0 0.0
    %1697 = vmatprep.subr.mxu0 0.0
    %1698 = vmatpush1.msra.mxu0 0.0
    %1699 = vmatprep.subr.mxu0 0.0
    %1700 = vmatpush1.msra.mxu0 0.0
    %1701 = vmatprep.subr.mxu0 0.0
    %1702 = vmatpush1.msra.mxu0 0.0
    %1703 = vmatprep.subr.mxu0 0.0
    %1704 = vmatpush1.msra.mxu0 0.0
    %1705 = vmatprep.subr.mxu0 0.0
    %1706 = vmatpush1.msra.mxu0 0.0
    %1707 = vmatprep.subr.mxu0 0.0
    %1708 = vmatpush1.msra.mxu0 0.0
    %1709 = vmatprep.subr.mxu0 0.0
    %1710 = vmatpush1.msra.mxu0 0.0
    %1711 = vmatprep.subr.mxu0 0.0
    %1712 = vmatpush1.msra.mxu0 0.0
    %1713 = vmatprep.subr.mxu0 0.0
    %1714 = vmatpush1.msra.mxu0 0.0
    %1715 = vmatprep.subr.mxu0 0.0
    %1716 = vmatpush1.msra.mxu0 0.0
    %1717 = vmatprep.subr.mxu0 0.0
    %1718 = vmatpush1.msra.mxu0 0.0
    %1719 = vmatprep.subr.mxu0 0.0
    %1720 = vmatpush1.msra.mxu0 0.0
    %1721 = vmatprep.mubr.f32.mxu0 0.0
    %1722 = vmatmul.mubr.f32.gmra.mrb[0].mxu0 %v1387
    %v1723 = vpop.f32.mrb[0].mxu0
    %v1724 = vadd.f32 %v1653, %v1723
    %v1725 = vpop.f32.mrb[0].mxu0
    %v1726 = vadd.f32 %v1655, %v1725
    %1727 = vdwg.mxu0
    %1728 = vmatprep.subr.mxu0 %v1391
    %1729 = vmatpush1.msra.mxu0 %v1390
    %1730 = vmatprep.subr.mxu0 %v1395
    %1731 = vmatpush1.msra.mxu0 %v1394
    %1732 = vmatprep.subr.mxu0 %v1399
    %1733 = vmatpush1.msra.mxu0 %v1398
    %1734 = vmatprep.subr.mxu0 %v1403
    %1735 = vmatpush1.msra.mxu0 %v1402
    %1736 = vmatprep.subr.mxu0 %v1407
    %1737 = vmatpush1.msra.mxu0 %v1406
    %1738 = vmatprep.subr.mxu0 %v1411
    %1739 = vmatpush1.msra.mxu0 %v1410
    %1740 = vmatprep.subr.mxu0 %v1415
    %1741 = vmatpush1.msra.mxu0 %v1414
    %1742 = vmatprep.subr.mxu0 %v1419
    %1743 = vmatpush1.msra.mxu0 %v1418
    %1744 = vmatprep.subr.mxu0 %v1423
    %1745 = vmatpush1.msra.mxu0 %v1422
    %1746 = vmatprep.subr.mxu0 %v1427
    %1747 = vmatpush1.msra.mxu0 %v1426
    %1748 = vmatprep.subr.mxu0 %v1431
    %1749 = vmatpush1.msra.mxu0 %v1430
    %1750 = vmatprep.subr.mxu0 %v1435
    %1751 = vmatpush1.msra.mxu0 %v1434
    %1752 = vmatprep.subr.mxu0 %v1439
    %1753 = vmatpush1.msra.mxu0 %v1438
    %1754 = vmatprep.subr.mxu0 %v1443
    %1755 = vmatpush1.msra.mxu0 %v1442
    %1756 = vmatprep.subr.mxu0 %v1447
    %1757 = vmatpush1.msra.mxu0 %v1446
    %1758 = vmatprep.subr.mxu0 %v1451
    %1759 = vmatpush1.msra.mxu0 %v1450
    %1760 = vmatprep.subr.mxu0 %v1455
    %1761 = vmatpush1.msra.mxu0 %v1454
    %1762 = vmatprep.subr.mxu0 %v1459
    %1763 = vmatpush1.msra.mxu0 %v1458
    %1764 = vmatprep.subr.mxu0 %v1463
    %1765 = vmatpush1.msra.mxu0 %v1462
    %1766 = vmatprep.subr.mxu0 %v1467
    %1767 = vmatpush1.msra.mxu0 %v1466
    %1768 = vmatprep.subr.mxu0 %v1471
    %1769 = vmatpush1.msra.mxu0 %v1470
    %1770 = vmatprep.subr.mxu0 %v1475
    %1771 = vmatpush1.msra.mxu0 %v1474
    %1772 = vmatprep.subr.mxu0 %v1479
    %1773 = vmatpush1.msra.mxu0 %v1478
    %1774 = vmatprep.subr.mxu0 %v1483
    %1775 = vmatpush1.msra.mxu0 %v1482
    %1776 = vmatprep.subr.mxu0 %v1487
    %1777 = vmatpush1.msra.mxu0 %v1486
    %1778 = vmatprep.subr.mxu0 %v1491
    %1779 = vmatpush1.msra.mxu0 %v1490
    %1780 = vmatprep.subr.mxu0 %v1495
    %1781 = vmatpush1.msra.mxu0 %v1494
    %1782 = vmatprep.subr.mxu0 %v1499
    %1783 = vmatpush1.msra.mxu0 %v1498
    %1784 = vmatprep.subr.mxu0 %v1503
    %1785 = vmatpush1.msra.mxu0 %v1502
    %1786 = vmatprep.subr.mxu0 %v1507
    %1787 = vmatpush1.msra.mxu0 %v1506
    %1788 = vmatprep.subr.mxu0 %v1511
    %1789 = vmatpush1.msra.mxu0 %v1510
    %1790 = vmatprep.subr.mxu0 %v1515
    %1791 = vmatpush1.msra.mxu0 %v1514
    %1792 = vmatprep.mubr.f32.mxu0 %v1386
    %1793 = vmatmul.mubr.f32.gmra.mrb[0].mxu0 %v1385
    %v1794 = vpop.f32.mrb[0].mxu0
    %v1795 = vadd.f32 %v1584, %v1794
    %v1796 = vpop.f32.mrb[0].mxu0
    %v1797 = vadd.f32 %v1584, %v1796
    %1798 = vdwg.mxu0
    %1799 = vmatprep.subr.mxu0 %v1519
    %1800 = vmatpush1.msra.mxu0 %v1518
    %1801 = vmatprep.subr.mxu0 %v1523
    %1802 = vmatpush1.msra.mxu0 %v1522
    %1803 = vmatprep.subr.mxu0 %v1527
    %1804 = vmatpush1.msra.mxu0 %v1526
    %1805 = vmatprep.subr.mxu0 %v1531
    %1806 = vmatpush1.msra.mxu0 %v1530
    %1807 = vmatprep.subr.mxu0 %v1535
    %1808 = vmatpush1.msra.mxu0 %v1534
    %1809 = vmatprep.subr.mxu0 %v1539
    %1810 = vmatpush1.msra.mxu0 %v1538
    %1811 = vmatprep.subr.mxu0 %v1543
    %1812 = vmatpush1.msra.mxu0 %v1542
    %1813 = vmatprep.subr.mxu0 %v1547
    %1814 = vmatpush1.msra.mxu0 %v1546
    %1815 = vmatprep.subr.mxu0 %v1551
    %1816 = vmatpush1.msra.mxu0 %v1550
    %1817 = vmatprep.subr.mxu0 %v1555
    %1818 = vmatpush1.msra.mxu0 %v1554
    %1819 = vmatprep.subr.mxu0 %v1559
    %1820 = vmatpush1.msra.mxu0 %v1558
    %1821 = vmatprep.subr.mxu0 %v1563
    %1822 = vmatpush1.msra.mxu0 %v1562
    %1823 = vmatprep.subr.mxu0 %v1567
    %1824 = vmatpush1.msra.mxu0 %v1566
    %1825 = vmatprep.subr.mxu0 %v1571
    %1826 = vmatpush1.msra.mxu0 %v1570
    %1827 = vmatprep.subr.mxu0 %v1575
    %1828 = vmatpush1.msra.mxu0 %v1574
    %1829 = vmatprep.subr.mxu0 %v1579
    %1830 = vmatpush1.msra.mxu0 %v1578
    %1831 = vmatprep.subr.mxu0 0.0
    %1832 = vmatpush1.msra.mxu0 0.0
    %1833 = vmatprep.subr.mxu0 0.0
    %1834 = vmatpush1.msra.mxu0 0.0
    %1835 = vmatprep.subr.mxu0 0.0
    %1836 = vmatpush1.msra.mxu0 0.0
    %1837 = vmatprep.subr.mxu0 0.0
    %1838 = vmatpush1.msra.mxu0 0.0
    %1839 = vmatprep.subr.mxu0 0.0
    %1840 = vmatpush1.msra.mxu0 0.0
    %1841 = vmatprep.subr.mxu0 0.0
    %1842 = vmatpush1.msra.mxu0 0.0
    %1843 = vmatprep.subr.mxu0 0.0
    %1844 = vmatpush1.msra.mxu0 0.0
    %1845 = vmatprep.subr.mxu0 0.0
    %1846 = vmatpush1.msra.mxu0 0.0
    %1847 = vmatprep.subr.mxu0 0.0
    %1848 = vmatpush1.msra.mxu0 0.0
    %1849 = vmatprep.subr.mxu0 0.0
    %1850 = vmatpush1.msra.mxu0 0.0
    %1851 = vmatprep.subr.mxu0 0.0
    %1852 = vmatpush1.msra.mxu0 0.0
    %1853 = vmatprep.subr.mxu0 0.0
    %1854 = vmatpush1.msra.mxu0 0.0
    %1855 = vmatprep.subr.mxu0 0.0
    %1856 = vmatpush1.msra.mxu0 0.0
    %1857 = vmatprep.subr.mxu0 0.0
    %1858 = vmatpush1.msra.mxu0 0.0
    %1859 = vmatprep.subr.mxu0 0.0
    %1860 = vmatpush1.msra.mxu0 0.0
    %1861 = vmatprep.subr.mxu0 0.0
    %1862 = vmatpush1.msra.mxu0 0.0
    %1863 = vmatprep.mubr.f32.mxu0 0.0
    %1864 = vmatmul.mubr.f32.gmra.mrb[0].mxu0 %v1387
    %v1865 = vpop.f32.mrb[0].mxu0
    %v1866 = vadd.f32 %v1795, %v1865
    %v1867 = vpop.f32.mrb[0].mxu0
    %v1868 = vadd.f32 %v1797, %v1867
    %1869 = vdwg.mxu0
    %1870 = vst [vmem:[#allocation8] sm:$0xff] %v1724
    %1871 = vst [vmem:[#allocation8 + $0x8] sm:$0xff] %v1726
    %1872 = vst [vmem:[#allocation8 + $0x10] sm:$0xff] %v1866
    %1873 = vst [vmem:[#allocation8 + $0x18] sm:$0xff] %v1868
    // Predicated region
    $region33: #{tpu_custom_call.1} parent=1 // pred_check
      _
    $region34: #{tpu_custom_call.1} parent=1 // pred_check_branch
      %1875 = sbr.rel (0) target = $region36
    $region35: #{tpu_custom_call.1} parent=1 // pred_region
      %s1877 = ssub.s32 512, 512
      %1878 = vsyncadd [#allocation5], %s1877
      %s1880 = sshll.u32 [#allocation8], 4
      %s1881 = int_to_ptr.vmem [resolvable:$true] %s1880
      %1883 = dma.vmem_to_hbm [thread:$0]  %s1881, 512, %s3, [#allocation5]
    $region36: #{tpu_custom_call.1} parent=1 // pred_fallthru
      _
    // Predicated region
    $region37: #{tpu_custom_call.1} parent=1 // pred_check
      _
    $region38: #{tpu_custom_call.1} parent=1 // pred_check_branch
      %1885 = sbr.rel (0) target = $region40
    $region39: #{tpu_custom_call.1} parent=1 // pred_region
      %1886 = dma.done [#allocation5], 512
    $region40: #{tpu_custom_call.1} parent=1 // pred_fallthru
      _
    %1887 = vsyncpa [#allocation4], 1
    %1888 = vsyncpa [#allocation7], 1
    %1889 = vsyncpa [#allocation5], 1

</llo_original>
